<compile_context>
chip_gen: v6e
topology: v6e:2x2x1
jax: 0.10.0
libtpu: 0.0.40
codegen_flags: <defaults>
</compile_context>

<pallas_src>
import functools

import jax
import jax.numpy as jnp
from jax.experimental import pallas as pl
from jax.experimental.pallas import tpu as pltpu

EPS = 1e-5      # nn.BatchNorm2d eps
LANE = 128


def _round_up(x, m):
    return (x + m - 1) // m * m


def _cdiv(a, b):
    return -(-a // b)


def _pair(v):
    return (v, v) if isinstance(v, int) else tuple(v)


def _sublane_tile(dtype):
    return {4: 8, 2: 16, 1: 32}[jnp.dtype(dtype).itemsize]


def _vmem_limit_bytes():
    """Generation-aware VMEM limit: ~48 MiB on v7x, ~96 MiB on v5e/v6e."""
    cap = 64 * 1024 * 1024          # conservative fallback (v7x per-core VMEM)
    try:
        info = pltpu.get_tpu_info()
        cap = int(getattr(info, "vmem_capacity_bytes", cap) or cap)
    except Exception:
        pass
    return min(cap * 3 // 4, 112 * 1024 * 1024)


def _pick_tile_m(m_true, k_pad, c_pad, in_itemsize, y_itemsize, vmem_limit,
                 requested=None):
    """Largest M tile that fits the VMEM budget, MXU/sublane aligned, with
    at least 2 grid steps so the 'parallel' axis can feed both v7x cores."""
    # VMEM use: 2x col block + 2x y block + (<=2x) weight block (+ tiny stats).
    budget = vmem_limit * 3 // 4 - 2 * k_pad * c_pad * in_itemsize
    per_row = 2 * (k_pad * in_itemsize + c_pad * y_itemsize)
    cap = max(budget // per_row, 16)
    # TODO(synk): when the weight block alone blows the budget (huge K), add a
    #             K-split grid axis with a VMEM accumulator instead of cap=16.
    tile = min(requested if requested is not None else 512, cap)
    if tile >= 256:
        tile = (tile // 256) * 256          # MXU-M cadence on v6e/v7x
    else:
        tile = max(16, (tile // 16) * 16)   # bf16 sublane tile
    while tile > 16 and _cdiv(m_true, tile) < 2:
        tile = max(16, (tile // 2) // 16 * 16)
    return tile


# -----------------------------------------------------------------------------
# Kernel 1: fused-K conv matmul + per-tile partial BN statistics (mean, M2)
# -----------------------------------------------------------------------------
def _conv_stats_kernel(col_ref, w_ref, y_ref, stats_ref, *, m_true, tile_m):
    """col_ref:   (TILE_M, K_pad)   im2col rows (compute dtype)
       w_ref:     (K_pad, C_pad)    conv weights, taps fused into K
       y_ref:     (TILE_M, C_pad)   conv output for this tile (compute dtype)
       stats_ref: (1, 2, C_pad)     f32 per-tile [mean, M2] (valid rows only)
    """
    acc = jnp.dot(col_ref[...], w_ref[...], preferred_element_type=jnp.float32)
    y_ref[...] = acc.astype(y_ref.dtype)

    # Per-tile mean / centered sum-of-squares over the valid (non-padded) rows.
    n_valid = jnp.minimum(m_true - pl.program_id(0) * tile_m, tile_m)
    inv_n = 1.0 / n_valid.astype(jnp.float32)
    mean = jnp.sum(acc, axis=0, keepdims=True) * inv_n          # (1, C)
    row = jax.lax.broadcasted_iota(jnp.int32, (tile_m, 1), 0)
    valid = (row < n_valid).astype(jnp.float32)                 # (TILE_M, 1)
    delta = (acc - mean) * valid
    m2 = jnp.sum(delta * delta, axis=0, keepdims=True)          # (1, C)

    # Two direct stores (no sublane concatenate in the epilogue).
    stats_ref[0:1, 0:1, :] = mean[None]
    stats_ref[0:1, 1:2, :] = m2[None]


# -----------------------------------------------------------------------------
# Kernel 2: per-channel affine (folded BN / bias) + optional ReLU
# -----------------------------------------------------------------------------
def _affine_relu_kernel(y_ref, scale_ref, shift_ref, o_ref, *, apply_relu):
    y = y_ref[...].astype(jnp.float32) * scale_ref[...] + shift_ref[...]
    if apply_relu:
        y = jnp.maximum(y, 0.0)
    o_ref[...] = y.astype(o_ref.dtype)


# -----------------------------------------------------------------------------
# Host-side glue
# -----------------------------------------------------------------------------
def _im2col(x_nhwc, ksize, stride, padding, dilation):
    """(B, H, W, C) -> (B*Ho*Wo, kh*kw*C), K laid out tap-major / channel-minor."""
    b, h, w, c = x_nhwc.shape
    kh, kw = ksize
    sh, sw = stride
    ph, pw = padding
    dh, dw = dilation
    xp = jnp.pad(x_nhwc, ((0, 0), (ph, ph), (pw, pw), (0, 0)))
    hp, wp = h + 2 * ph, w + 2 * pw
    ho = (hp - dh * (kh - 1) - 1) // sh + 1
    wo = (wp - dw * (kw - 1) - 1) // sw + 1
    taps = []
    for i in range(kh):
        for j in range(kw):
            patch = xp[:, i * dh: i * dh + (ho - 1) * sh + 1: sh,
                          j * dw: j * dw + (wo - 1) * sw + 1: sw, :]
            taps.append(patch.reshape(b, ho * wo, c))
    col = jnp.concatenate(taps, axis=-1)                 # (B, Ho*Wo, kh*kw*C)
    return col.reshape(b * ho * wo, kh * kw * c), ho, wo


def basic_conv_forward_nhwc(x_nhwc, weight_oihw, gamma=None, beta=None, bias=None, *,
                            stride=1, padding=0, dilation=1, groups=1,
                            relu=True, bn=True,
                            compute_dtype=jnp.bfloat16, tile_m=None):
    """BasicConv.forward on NHWC input (returns NHWC)."""
    if groups != 1:
        # TODO(synk): grouped conv has no clean single-matmul mapping here.
        raise NotImplementedError("groups > 1 not supported")
    if bn and (gamma is None or beta is None):
        raise ValueError("bn=True requires gamma and beta")
    stride, padding, dilation = _pair(stride), _pair(padding), _pair(dilation)

    b, h, w, cin = x_nhwc.shape
    cout, cin_w, kh, kw = weight_oihw.shape
    assert cin_w == cin, f"weight expects Cin={cin_w}, input has Cin={cin}"
    out_dtype = x_nhwc.dtype

    # im2col (host-side for now, see module TODO) with the kh*kw taps fused
    # into the contraction dim; weights OIHW -> (kh*kw*Cin, Cout).
    col, ho, wo = _im2col(x_nhwc, (kh, kw), stride, padding, dilation)
    m_true, k_true = col.shape
    w_mat = jnp.transpose(weight_oihw, (2, 3, 1, 0)).reshape(k_true, cout)

    in_itemsize = jnp.dtype(compute_dtype).itemsize
    y_itemsize = in_itemsize                      # y stored in compute_dtype
    out_itemsize = jnp.dtype(out_dtype).itemsize

    # Minimal padding: K only to the dtype sublane tile (K block == full dim,
    # so the (8,128) lane rule is satisfied); Cout to a lane multiple.
    k_pad = _round_up(k_true, _sublane_tile(compute_dtype))
    c_pad = _round_up(cout, LANE)

    vmem_limit = _vmem_limit_bytes()
    tile_m = _pick_tile_m(m_true, k_pad, c_pad, in_itemsize, y_itemsize,
                          vmem_limit, tile_m)
    m_pad = _round_up(m_true, tile_m)
    n_tiles = m_pad // tile_m

    col_p = jnp.pad(col.astype(compute_dtype),
                    ((0, m_pad - m_true), (0, k_pad - k_true)))
    w_p = jnp.pad(w_mat.astype(compute_dtype),
                  ((0, k_pad - k_true), (0, c_pad - cout)))

    cparams = pltpu.CompilerParams(dimension_semantics=("parallel",),
                                   vmem_limit_bytes=vmem_limit)
    cost1 = pl.CostEstimate(
        flops=2 * m_pad * k_pad * c_pad,
        transcendentals=0,
        bytes_accessed=(m_pad * k_pad * in_itemsize + k_pad * c_pad * in_itemsize
                        + m_pad * c_pad * y_itemsize + n_tiles * 2 * c_pad * 4))
    kern1 = functools.partial(_conv_stats_kernel, m_true=m_true, tile_m=tile_m)

    # ---- phase 1: conv matmul + partial statistics --------------------------
    def run_phase1(w_spec):
        return pl.pallas_call(
            kern1,
            grid=(n_tiles,),
            in_specs=[pl.BlockSpec((tile_m, k_pad), lambda i: (i, 0)), w_spec],
            out_specs=[pl.BlockSpec((tile_m, c_pad), lambda i: (i, 0)),
                       pl.BlockSpec((1, 2, c_pad), lambda i: (i, 0, 0))],
            out_shape=[jax.ShapeDtypeStruct((m_pad, c_pad), compute_dtype),
                       jax.ShapeDtypeStruct((n_tiles, 2, c_pad), jnp.float32)],
            compiler_params=cparams,
            cost_estimate=cost1,
        )(col_p, w_p)

    try:
        # Constant-index weight block: single-buffer it (double buffering only
        # doubles its VMEM footprint, which matters under v7x's 64 MiB cap).
        y, stats = run_phase1(
            pl.BlockSpec((k_pad, c_pad), lambda i: (0, 0),
                         pipeline_mode=pl.Buffered(buffer_count=1)))
    except Exception:  # pipeline_mode / Buffered(1) unsupported on this jax
        y, stats = run_phase1(pl.BlockSpec((k_pad, c_pad), lambda i: (0, 0)))

    # ---- fold BN / bias into a per-channel (scale, shift) -------------------
    if bn:
        # Pooled (Chan) combine of per-tile (count, mean, M2): numerically
        # stable vs. E[y^2] - mean^2.
        counts = jnp.minimum(
            jnp.float32(m_true) - jnp.arange(n_tiles, dtype=jnp.float32) * tile_m,
            jnp.float32(tile_m))[:, None]                    # (n_tiles, 1)
        means, m2s = stats[:, 0, :], stats[:, 1, :]
        total = jnp.float32(m_true)                          # true N*Ho*Wo
        mean = jnp.sum(counts * means, axis=0) / total       # (c_pad,)
        var = (jnp.sum(m2s, axis=0)
               + jnp.sum(counts * (means - mean[None, :]) ** 2, axis=0)) / total
        var = jnp.maximum(var, 0.0)                          # biased batch var
        gamma_p = jnp.pad(gamma.astype(jnp.float32), (0, c_pad - cout))
        beta_p = jnp.pad(beta.astype(jnp.float32), (0, c_pad - cout))
        scale = gamma_p * jax.lax.rsqrt(var + EPS)
        shift = beta_p - mean * scale
        # (a conv bias is exactly cancelled by batch normalization)
    else:
        scale = jnp.ones((c_pad,), jnp.float32)
        shift = (jnp.pad(bias.astype(jnp.float32), (0, c_pad - cout))
                 if bias is not None else jnp.zeros((c_pad,), jnp.float32))
    scale = scale.reshape(1, c_pad)
    shift = shift.reshape(1, c_pad)

    # ---- phase 2: normalize / bias + ReLU ------------------------------------
    cost2 = pl.CostEstimate(
        flops=3 * m_pad * c_pad,
        transcendentals=0,
        bytes_accessed=(m_pad * c_pad * (y_itemsize + out_itemsize)
                        + 2 * c_pad * 4))
    alias = ({0: 0} if jnp.dtype(compute_dtype) == jnp.dtype(out_dtype) else {})
    out = pl.pallas_call(
        functools.partial(_affine_relu_kernel, apply_relu=relu),
        grid=(n_tiles,),
        in_specs=[pl.BlockSpec((tile_m, c_pad), lambda i: (i, 0)),
                  pl.BlockSpec((1, c_pad), lambda i: (0, 0)),
                  pl.BlockSpec((1, c_pad), lambda i: (0, 0))],
        out_specs=pl.BlockSpec((tile_m, c_pad), lambda i: (i, 0)),
        out_shape=jax.ShapeDtypeStruct((m_pad, c_pad), out_dtype),
        compiler_params=cparams,
        cost_estimate=cost2,
        input_output_aliases=alias,
    )(y, scale, shift)

    return out[:m_true, :cout].reshape(b, ho, wo, cout)


def basic_conv_forward(x_nchw, weight_oihw, gamma=None, beta=None, bias=None, *,
                       stride=1, padding=0, dilation=1, groups=1,
                       relu=True, bn=True,
                       compute_dtype=jnp.bfloat16, tile_m=None):
    """BasicConv.forward with PyTorch NCHW layout.  NOTE: if the surrounding
    model is NHWC, call basic_conv_forward_nhwc directly and skip the two
    layout transposes (pure HBM overhead on a mem-bound op)."""
    x_nhwc = jnp.transpose(x_nchw, (0, 2, 3, 1))
    out = basic_conv_forward_nhwc(
        x_nhwc, weight_oihw, gamma, beta, bias,
        stride=stride, padding=padding, dilation=dilation, groups=groups,
        relu=relu, bn=bn, compute_dtype=compute_dtype, tile_m=tile_m)
    return jnp.transpose(out, (0, 3, 1, 2))                  # NHWC -> NCHW


# -----------------------------------------------------------------------------
# Pure-JAX reference (for correctness check)
# -----------------------------------------------------------------------------
def ref_basic_conv(x_nchw, weight_oihw, gamma=None, beta=None, bias=None, *,
                   stride=1, padding=0, dilation=1, relu=True, bn=True,
                   compute_dtype=jnp.float32):
    stride, padding, dilation = _pair(stride), _pair(padding), _pair(dilation)
    y = jax.lax.conv_general_dilated(
        x_nchw.astype(compute_dtype), weight_oihw.astype(compute_dtype),
        window_strides=stride,
        padding=[(padding[0], padding[0]), (padding[1], padding[1])],
        rhs_dilation=dilation,
        dimension_numbers=("NCHW", "OIHW", "NCHW"),
        preferred_element_type=jnp.float32)
    if bias is not None and not bn:
        y = y + bias[None, :, None, None]
    if bn:
        mean = jnp.mean(y, axis=(0, 2, 3), keepdims=True)
        var = jnp.mean((y - mean) ** 2, axis=(0, 2, 3), keepdims=True)
        y = (y - mean) * jax.lax.rsqrt(var + EPS)
        y = y * gamma[None, :, None, None] + beta[None, :, None, None]
    if relu:
        y = jnp.maximum(y, 0.0)
    return y.astype(x_nchw.dtype)


# -----------------------------------------------------------------------------
if __name__ == "__main__":
    key = jax.random.PRNGKey(0)
    k1, k2, k3, k4 = jax.random.split(key, 4)

    B, Cin, H, W = 2, 4, 16, 16
    Cout, ks = 8, 3

    x = jax.random.normal(k1, (B, Cin, H, W), jnp.float32)          # NCHW
    w = jax.random.normal(k2, (Cout, Cin, ks, ks), jnp.float32) * 0.1
    gamma = 1.0 + 0.1 * jax.random.normal(k3, (Cout,), jnp.float32)
    beta = 0.1 * jax.random.normal(k4, (Cout,), jnp.float32)

    # --- f32 MXU operands: strict check --------------------------------------
    out = jax.block_until_ready(basic_conv_forward(
        x, w, gamma, beta, stride=1, padding=1, relu=True, bn=True,
        compute_dtype=jnp.float32))
    ref = jax.block_until_ready(ref_basic_conv(
        x, w, gamma, beta, stride=1, padding=1, relu=True, bn=True))
    assert out.shape == (B, Cout, H, W) and out.dtype == x.dtype
    assert jnp.allclose(out, ref, atol=2e-4, rtol=2e-4), (
        f"f32 mismatch: max abs err {jnp.max(jnp.abs(out - ref))}")

    # --- bf16 MXU operands + bf16 y intermediate (fast path) ------------------
    out_bf = jax.block_until_ready(basic_conv_forward(
        x, w, gamma, beta, stride=1, padding=1, relu=True, bn=True,
        compute_dtype=jnp.bfloat16))
    ref_bf = jax.block_until_ready(ref_basic_conv(
        x, w, gamma, beta, stride=1, padding=1, relu=True, bn=True,
        compute_dtype=jnp.bfloat16))
    assert jnp.allclose(out_bf, ref_bf, atol=3e-2, rtol=3e-2), (
        f"bf16 mismatch: max abs err {jnp.max(jnp.abs(out_bf - ref_bf))}")

    # --- stride-2, conv-only (bn=False, relu=False) ---------------------------
    out_s2 = jax.block_until_ready(basic_conv_forward(
        x, w, stride=2, padding=1, relu=False, bn=False,
        compute_dtype=jnp.float32))
    ref_s2 = jax.block_until_ready(ref_basic_conv(
        x, w, stride=2, padding=1, relu=False, bn=False))
    assert out_s2.shape == (B, Cout, H // 2, W // 2)
    assert jnp.allclose(out_s2, ref_s2, atol=2e-4, rtol=2e-4), (
        f"stride-2 mismatch: max abs err {jnp.max(jnp.abs(out_s2 - ref_s2))}")

    # --- NHWC entry point (no layout transposes) ------------------------------
    out_nhwc = jax.block_until_ready(basic_conv_forward_nhwc(
        jnp.transpose(x, (0, 2, 3, 1)), w, gamma, beta,
        stride=1, padding=1, relu=True, bn=True, compute_dtype=jnp.float32))
    assert jnp.allclose(jnp.transpose(out_nhwc, (0, 3, 1, 2)), ref,
                        atol=2e-4, rtol=2e-4)

    print("KERNEL_OK")
</pallas_src>

<mosaic_0001>
module attributes {stable_mosaic.version = 11 : i64} {
  func.func @_conv_stats_kernel(%arg0: i32, %arg1: memref<256x40xf32, #tpu.memory_space<vmem>>, %arg2: memref<40x128xf32, #tpu.memory_space<vmem>>, %arg3: memref<256x128xf32, #tpu.memory_space<vmem>>, %arg4: memref<1x2x128xf32, #tpu.memory_space<vmem>>) attributes {dimension_semantics = [#tpu.dimension_semantics<parallel>], iteration_bounds = array<i64: 2>, scalar_prefetch = 0 : i64, scratch_operands = 0 : i64, tpu.core_type = #tpu.core_type<tc>, window_params = [{transform_indices = @transform_0, window_bounds = array<i64: 256, 40>}, {pipeline_mode = #tpu.pipeline_mode<synchronous>, transform_indices = @transform_1, window_bounds = array<i64: 40, 128>}, {transform_indices = @transform_2, window_bounds = array<i64: 256, 128>}, {transform_indices = @transform_3, window_bounds = array<i64: 1, 2, 128>}]} {
    %c0 = arith.constant 0 : index
    %c0_0 = arith.constant 0 : index
    %0 = vector.load %arg1[%c0, %c0_0] : memref<256x40xf32, #tpu.memory_space<vmem>>, vector<256x40xf32>
    %c0_1 = arith.constant 0 : index
    %c0_2 = arith.constant 0 : index
    %1 = vector.load %arg2[%c0_1, %c0_2] : memref<40x128xf32, #tpu.memory_space<vmem>>, vector<40x128xf32>
    %cst = arith.constant dense<0.000000e+00> : vector<256x128xf32>
    %2 = tpu.matmul %0, %1, %cst {dimension_numbers = #tpu.dot_dimension_numbers<[1], [0], [0], [1], [0, 0, 1, 1], [], []>} : vector<256x40xf32>, vector<40x128xf32>, vector<256x128xf32> -> vector<256x128xf32>
    %c0_3 = arith.constant 0 : index
    %c0_4 = arith.constant 0 : index
    %3 = vector.load %arg3[%c0_3, %c0_4] : memref<256x128xf32, #tpu.memory_space<vmem>>, vector<256x128xf32>
    tpu.vector_store %arg3[%c0_3, %c0_4], %2 {strides = array<i32>} : memref<256x128xf32, #tpu.memory_space<vmem>>, vector<256x128xf32>,
    %c256_i32 = arith.constant 256 : i32
    %4 = arith.muli %arg0, %c256_i32 : i32
    %c512_i32 = arith.constant 512 : i32
    %5 = arith.subi %c512_i32, %4 : i32
    %c256_i32_5 = arith.constant 256 : i32
    %6 = arith.minsi %5, %c256_i32_5 : i32
    %7 = arith.sitofp %6 : i32 to f32
    %cst_6 = arith.constant 1.000000e+00 : f32
    %8 = arith.divf %cst_6, %7 : f32
    %cst_7 = arith.constant dense<0.000000e+00> : vector<128xf32>
    %9 = vector.multi_reduction <add>, %2, %cst_7 [0] : vector<256x128xf32> to vector<128xf32>
    %10 = vector.shape_cast %9 : vector<128xf32> to vector<1x128xf32>
    %11 = vector.broadcast %8 : f32 to vector<1x128xf32>
    %12 = arith.mulf %10, %11 : vector<1x128xf32>
    %13 = tpu.iota {dimensions = array<i32: 0>} : vector<256x1xi32>
    %14 = vector.broadcast %6 : i32 to vector<256x1xi32>
    %15 = arith.cmpi slt, %13, %14 : vector<256x1xi32>
    %16 = arith.extui %15 : vector<256x1xi1> to vector<256x1xi32>
    %17 = arith.sitofp %16 : vector<256x1xi32> to vector<256x1xf32>
    %18 = vector.broadcast %12 : vector<1x128xf32> to vector<256x128xf32>
    %19 = arith.subf %2, %18 : vector<256x128xf32>
    %20 = vector.broadcast %17 : vector<256x1xf32> to vector<256x128xf32>
    %21 = arith.mulf %19, %20 : vector<256x128xf32>
    %22 = arith.mulf %21, %21 : vector<256x128xf32>
    %cst_8 = arith.constant dense<0.000000e+00> : vector<128xf32>
    %23 = vector.multi_reduction <add>, %22, %cst_8 [0] : vector<256x128xf32> to vector<128xf32>
    %24 = vector.shape_cast %23 : vector<128xf32> to vector<1x128xf32>
    %25 = vector.shape_cast %12 : vector<1x128xf32> to vector<1x1x128xf32>
    %c0_9 = arith.constant 0 : index
    %c0_10 = arith.constant 0 : index
    %c0_11 = arith.constant 0 : index
    %26 = vector.load %arg4[%c0_9, %c0_10, %c0_11] : memref<1x2x128xf32, #tpu.memory_space<vmem>>, vector<1x1x128xf32>
    tpu.vector_store %arg4[%c0_9, %c0_10, %c0_11], %25 {strides = array<i32>} : memref<1x2x128xf32, #tpu.memory_space<vmem>>, vector<1x1x128xf32>,
    %27 = vector.shape_cast %24 : vector<1x128xf32> to vector<1x1x128xf32>
    %c0_12 = arith.constant 0 : index
    %c1 = arith.constant 1 : index
    %c0_13 = arith.constant 0 : index
    %28 = vector.load %arg4[%c0_12, %c1, %c0_13] : memref<1x2x128xf32, #tpu.memory_space<vmem>>, vector<1x1x128xf32>
    tpu.vector_store %arg4[%c0_12, %c1, %c0_13], %27 {strides = array<i32>} : memref<1x2x128xf32, #tpu.memory_space<vmem>>, vector<1x1x128xf32>,
    return
  }
  func.func @transform_0(%arg0: i32) -> (i32, i32) {
    %c0_i32 = arith.constant 0 : i32
    %c0_i32_0 = arith.constant 0 : i32
    return %arg0, %c0_i32 : i32, i32
  }
  func.func @transform_1(%arg0: i32) -> (i32, i32) {
    %c0_i32 = arith.constant 0 : i32
    %c0_i32_0 = arith.constant 0 : i32
    %c0_i32_1 = arith.constant 0 : i32
    return %c0_i32, %c0_i32_0 : i32, i32
  }
  func.func @transform_2(%arg0: i32) -> (i32, i32) {
    %c0_i32 = arith.constant 0 : i32
    %c0_i32_0 = arith.constant 0 : i32
    return %arg0, %c0_i32 : i32, i32
  }
  func.func @transform_3(%arg0: i32) -> (i32, i32, i32) {
    %c0_i32 = arith.constant 0 : i32
    %c0_i32_0 = arith.constant 0 : i32
    %c0_i32_1 = arith.constant 0 : i32
    return %arg0, %c0_i32, %c0_i32_0 : i32, i32, i32
  }
}

module attributes {stable_mosaic.version = 11 : i64} {
  func.func @_conv_stats_kernel(%arg0: i32, %arg1: memref<256x40xf32, #tpu.memory_space<vmem>>, %arg2: memref<40x128xf32, #tpu.memory_space<vmem>>, %arg3: memref<256x128xf32, #tpu.memory_space<vmem>>, %arg4: memref<1x2x128xf32, #tpu.memory_space<vmem>>) attributes {dimension_semantics = [#tpu.dimension_semantics<parallel>], iteration_bounds = array<i64: 2>, scalar_prefetch = 0 : i64, scratch_operands = 0 : i64, tpu.core_type = #tpu.core_type<tc>, window_params = [{transform_indices = @transform_0, window_bounds = array<i64: 256, 40>}, {pipeline_mode = #tpu.pipeline_mode<synchronous>, transform_indices = @transform_1, window_bounds = array<i64: 40, 128>}, {transform_indices = @transform_2, window_bounds = array<i64: 256, 128>}, {transform_indices = @transform_3, window_bounds = array<i64: 1, 2, 128>}]} {
    %c0 = arith.constant 0 : index
    %c0_0 = arith.constant 0 : index
    %0 = vector.load %arg1[%c0, %c0_0] : memref<256x40xf32, #tpu.memory_space<vmem>>, vector<256x40xf32>
    %c0_1 = arith.constant 0 : index
    %c0_2 = arith.constant 0 : index
    %1 = vector.load %arg2[%c0_1, %c0_2] : memref<40x128xf32, #tpu.memory_space<vmem>>, vector<40x128xf32>
    %cst = arith.constant dense<0.000000e+00> : vector<256x128xf32>
    %2 = tpu.matmul %0, %1, %cst {dimension_numbers = #tpu.dot_dimension_numbers<[1], [0], [0], [1], [0, 0, 1, 1], [], []>} : vector<256x40xf32>, vector<40x128xf32>, vector<256x128xf32> -> vector<256x128xf32>
    %c0_3 = arith.constant 0 : index
    %c0_4 = arith.constant 0 : index
    %3 = vector.load %arg3[%c0_3, %c0_4] : memref<256x128xf32, #tpu.memory_space<vmem>>, vector<256x128xf32>
    tpu.vector_store %arg3[%c0_3, %c0_4], %2 {strides = array<i32>} : memref<256x128xf32, #tpu.memory_space<vmem>>, vector<256x128xf32>,
    %c256_i32 = arith.constant 256 : i32
    %4 = arith.muli %arg0, %c256_i32 : i32
    %c512_i32 = arith.constant 512 : i32
    %5 = arith.subi %c512_i32, %4 : i32
    %c256_i32_5 = arith.constant 256 : i32
    %6 = arith.minsi %5, %c256_i32_5 : i32
    %7 = arith.sitofp %6 : i32 to f32
    %cst_6 = arith.constant 1.000000e+00 : f32
    %8 = arith.divf %cst_6, %7 : f32
    %cst_7 = arith.constant dense<0.000000e+00> : vector<128xf32>
    %9 = vector.multi_reduction <add>, %2, %cst_7 [0] : vector<256x128xf32> to vector<128xf32>
    %10 = vector.shape_cast %9 : vector<128xf32> to vector<1x128xf32>
    %11 = vector.broadcast %8 : f32 to vector<1x128xf32>
    %12 = arith.mulf %10, %11 : vector<1x128xf32>
    %13 = tpu.iota {dimensions = array<i32: 0>} : vector<256x1xi32>
    %14 = vector.broadcast %6 : i32 to vector<256x1xi32>
    %15 = arith.cmpi slt, %13, %14 : vector<256x1xi32>
    %16 = arith.extui %15 : vector<256x1xi1> to vector<256x1xi32>
    %17 = arith.sitofp %16 : vector<256x1xi32> to vector<256x1xf32>
    %18 = vector.broadcast %12 : vector<1x128xf32> to vector<256x128xf32>
    %19 = arith.subf %2, %18 : vector<256x128xf32>
    %20 = vector.broadcast %17 : vector<256x1xf32> to vector<256x128xf32>
    %21 = arith.mulf %19, %20 : vector<256x128xf32>
    %22 = arith.mulf %21, %21 : vector<256x128xf32>
    %cst_8 = arith.constant dense<0.000000e+00> : vector<128xf32>
    %23 = vector.multi_reduction <add>, %22, %cst_8 [0] : vector<256x128xf32> to vector<128xf32>
    %24 = vector.shape_cast %23 : vector<128xf32> to vector<1x128xf32>
    %25 = vector.shape_cast %12 : vector<1x128xf32> to vector<1x1x128xf32>
    %c0_9 = arith.constant 0 : index
    %c0_10 = arith.constant 0 : index
    %c0_11 = arith.constant 0 : index
    %26 = vector.load %arg4[%c0_9, %c0_10, %c0_11] : memref<1x2x128xf32, #tpu.memory_space<vmem>>, vector<1x1x128xf32>
    tpu.vector_store %arg4[%c0_9, %c0_10, %c0_11], %25 {strides = array<i32>} : memref<1x2x128xf32, #tpu.memory_space<vmem>>, vector<1x1x128xf32>,
    %27 = vector.shape_cast %24 : vector<1x128xf32> to vector<1x1x128xf32>
    %c0_12 = arith.constant 0 : index
    %c1 = arith.constant 1 : index
    %c0_13 = arith.constant 0 : index
    %28 = vector.load %arg4[%c0_12, %c1, %c0_13] : memref<1x2x128xf32, #tpu.memory_space<vmem>>, vector<1x1x128xf32>
    tpu.vector_store %arg4[%c0_12, %c1, %c0_13], %27 {strides = array<i32>} : memref<1x2x128xf32, #tpu.memory_space<vmem>>, vector<1x1x128xf32>,
    return
  }
  func.func @transform_0(%arg0: i32) -> (i32, i32) {
    %c0_i32 = arith.constant 0 : i32
    %c0_i32_0 = arith.constant 0 : i32
    return %arg0, %c0_i32 : i32, i32
  }
  func.func @transform_1(%arg0: i32) -> (i32, i32) {
    %c0_i32 = arith.constant 0 : i32
    %c0_i32_0 = arith.constant 0 : i32
    %c0_i32_1 = arith.constant 0 : i32
    return %c0_i32, %c0_i32_0 : i32, i32
  }
  func.func @transform_2(%arg0: i32) -> (i32, i32) {
    %c0_i32 = arith.constant 0 : i32
    %c0_i32_0 = arith.constant 0 : i32
    return %arg0, %c0_i32 : i32, i32
  }
  func.func @transform_3(%arg0: i32) -> (i32, i32, i32) {
    %c0_i32 = arith.constant 0 : i32
    %c0_i32_0 = arith.constant 0 : i32
    %c0_i32_1 = arith.constant 0 : i32
    return %arg0, %c0_i32, %c0_i32_0 : i32, i32, i32
  }
}

</mosaic_0001>

<llo_original>
// kernel: tpu_custom_call.1
$region0: #{tpu_custom_call.1}
  #allocation0 [shape = 'u32[]', space=smem, size = 0x4, offset = 0x4, fixed_abs, tag = 'smem constant byte address 0x4 - core index']
  #allocation1 [shape = 'u32[144,128]{1,0:T(1,128)}', space=vmem, size = 0x12000, scoped, tag = 'internal scratch']
  %s0 = inlined_call_operand.vmem [shape: f32[512,40], index: 0, kind: input, shape index: {}]
  %s1 = inlined_call_operand.vmem [shape: f32[40,128], index: 1, kind: input, shape index: {}]
  %s2 = inlined_call_operand.hbm [shape: f32[512,128], index: 2, kind: output, shape index: {0}]
  %s3 = inlined_call_operand.hbm [shape: f32[2,2,128], index: 3, kind: output, shape index: {1}]
  %4 = xla_tuple %s2, %s3
  %s5 = sld [smem:[#allocation0]]
  $region49: #{tpu_custom_call.1} parent=0
    _
  %s7 = ssub.s32 1, %s5
  %s8 = scalar_select 0, %s7, %s5
  $region1: #{tpu_custom_call.1} parent=0
    #allocation2 [shape = 'u8[262144]{0}', space=vmem, size = 0x40000, scoped, tag = 'output window, operand 0']
    #allocation3 [shape = 's32[2]{0}', space=sflag, size = 0x8, scoped, tag = 'scoped memory for tpu_custom_call.1']
    #allocation4 [shape = 'u8[2048]{0}', space=vmem, size = 0x800, scoped, tag = 'output window, operand 1']
    #allocation5 [shape = 's32[2]{0}', space=sflag, size = 0x8, scoped, tag = 'scoped memory for tpu_custom_call.1']
    %9 = vsyncpa [#allocation3], 0
    %s10 = scalar_lea.sflag [#allocation3], 1
    %11 = vsyncpa %s10, 0
    %12 = vsyncpa [#allocation5], 0
    %s13 = scalar_lea.sflag [#allocation5], 1
    %14 = vsyncpa %s13, 0
    loop: start=0, step=1, limit=4
    $region2: #{tpu_custom_call.1} parent=1 // loop_pre_header
      _
    $region3: #{tpu_custom_call.1} parent=1 // loop_header
      %s16 = sphi 0, %s20
      %p17 = scmp.ge.s32.totalorder %s16, 4
      %s26 = sphi 0, %s28
      %s29 = sphi 0, %s26
      %s30 = sphi 0, %s29
      %s46 = sphi 0, %s30
      %s50 = sphi 0, %s50
      %s52 = sphi 0, %s50
      %s53 = sphi 0, %s52
      %s67 = sphi 0, %s53
      %s73 = sphi 0, %s75
      %s76 = sphi 0, %s73
      %s77 = sphi 0, %s76
      %s93 = sphi 0, %s77
      %s99 = sphi 0, %s101
      %s102 = sphi 0, %s99
      %s103 = sphi 0, %s102
      %s119 = sphi 0, %s103
    $region4: #{tpu_custom_call.1} parent=1 // loop_header_branch
      %19 = sbr.rel (%p17) target = $region8
    $region5: #{tpu_custom_call.1} parent=1 // loop_body
      %s21 = ssub.s32 %s16, 1
      %s22 = ssub.s32 %s16, 2
      %s23 = sadd.s32 %s16, 1
      %s24 = ssub.s32 %s16, %s23
      %p25 = scmp.eq.s32.totalorder %s24, 0
      %s27 = sadd.s32 %s26, 1
      %s28 = scalar_select %p25, %s26, %s27
      %p31 = pneg %p25
      %p32 = scmp.eq.s32.totalorder %s16, 1
      %p33 = por %p31, %p32
      %p34 = scmp.ne.s32.totalorder %s26, %s29
      %p35 = scmp.eq.s32.totalorder %s16, 0
      %p36 = por %p34, %p35
      %p37 = scmp.ne.s32.totalorder %s26, %s29
      %p38 = scmp.eq.s32.totalorder %s21, 1
      %p39 = por %p37, %p38
      %p40 = scmp.ne.s32.totalorder %s29, %s30
      %p41 = scmp.eq.s32.totalorder %s21, 0
      %p42 = por %p40, %p41
      %p43 = scmp.ne.s32.totalorder %s29, %s30
      %p44 = scmp.eq.s32.totalorder %s22, 1
      %p45 = por %p43, %p44
      %p47 = scmp.ne.s32.totalorder %s30, %s46
      %p48 = scmp.eq.s32.totalorder %s22, 0
      %p49 = por %p47, %p48
      %s51 = sadd.s32 %s50, 1
      %p54 = scmp.eq.s32.totalorder %s16, 1
      %p55 = scmp.ne.s32.totalorder %s50, %s52
      %p56 = scmp.eq.s32.totalorder %s16, 0
      %p57 = por %p55, %p56
      %p58 = scmp.ne.s32.totalorder %s50, %s52
      %p59 = scmp.eq.s32.totalorder %s21, 1
      %p60 = por %p58, %p59
      %p61 = scmp.ne.s32.totalorder %s52, %s53
      %p62 = scmp.eq.s32.totalorder %s21, 0
      %p63 = por %p61, %p62
      %p64 = scmp.ne.s32.totalorder %s52, %s53
      %p65 = scmp.eq.s32.totalorder %s22, 1
      %p66 = por %p64, %p65
      %p68 = scmp.ne.s32.totalorder %s53, %s67
      %p69 = scmp.eq.s32.totalorder %s22, 0
      %p70 = por %p68, %p69
      %s71 = ssub.s32 %s16, %s23
      %p72 = scmp.eq.s32.totalorder %s71, 0
      %s74 = sadd.s32 %s73, 1
      %s75 = scalar_select %p72, %s73, %s74
      %p78 = pneg %p72
      %p79 = scmp.eq.s32.totalorder %s16, 1
      %p80 = por %p78, %p79
      %p81 = scmp.ne.s32.totalorder %s73, %s76
      %p82 = scmp.eq.s32.totalorder %s16, 0
      %p83 = por %p81, %p82
      %p84 = scmp.ne.s32.totalorder %s73, %s76
      %p85 = scmp.eq.s32.totalorder %s21, 1
      %p86 = por %p84, %p85
      %p87 = scmp.ne.s32.totalorder %s76, %s77
      %p88 = scmp.eq.s32.totalorder %s21, 0
      %p89 = por %p87, %p88
      %p90 = scmp.ne.s32.totalorder %s76, %s77
      %p91 = scmp.eq.s32.totalorder %s22, 1
      %p92 = por %p90, %p91
      %p94 = scmp.ne.s32.totalorder %s77, %s93
      %p95 = scmp.eq.s32.totalorder %s22, 0
      %p96 = por %p94, %p95
      %s97 = ssub.s32 %s16, %s23
      %p98 = scmp.eq.s32.totalorder %s97, 0
      %s100 = sadd.s32 %s99, 1
      %s101 = scalar_select %p98, %s99, %s100
      %p104 = pneg %p98
      %p105 = scmp.eq.s32.totalorder %s16, 1
      %p106 = por %p104, %p105
      %p107 = scmp.ne.s32.totalorder %s99, %s102
      %p108 = scmp.eq.s32.totalorder %s16, 0
      %p109 = por %p107, %p108
      %p110 = scmp.ne.s32.totalorder %s99, %s102
      %p111 = scmp.eq.s32.totalorder %s21, 1
      %p112 = por %p110, %p111
      %p113 = scmp.ne.s32.totalorder %s102, %s103
      %p114 = scmp.eq.s32.totalorder %s21, 0
      %p115 = por %p113, %p114
      %p116 = scmp.ne.s32.totalorder %s102, %s103
      %p117 = scmp.eq.s32.totalorder %s22, 1
      %p118 = por %p116, %p117
      %p120 = scmp.ne.s32.totalorder %s103, %s119
      %p121 = scmp.eq.s32.totalorder %s22, 0
      %p122 = por %p120, %p121
      %p123 = scmp.le.s32.totalorder 1, %s16
      %p124 = scmp.lt.s32.totalorder %s16, 3
      %p125 = pnand %p123, %p124
      %p126 = pneg %p125
      // Predicated region
      $region9: #{tpu_custom_call.1} parent=5 // pred_check
        _
      $region10: #{tpu_custom_call.1} parent=5 // pred_check_branch
        %128 = sbr.rel (%p125) target = $region12
      $region11: #{tpu_custom_call.1} parent=5 // pred_region
        %s129 = ssub.s32 %s16, 1
        // Predicated region
        $region13: #{tpu_custom_call.1} parent=11 // pred_check
          %p130 = pneg %p63
        $region14: #{tpu_custom_call.1} parent=11 // pred_check_branch
          %132 = sbr.rel (%p130) target = $region16
        $region15: #{tpu_custom_call.1} parent=11 // pred_region
          _
        $region16: #{tpu_custom_call.1} parent=11 // pred_fallthru
          _
      $region12: #{tpu_custom_call.1} parent=5 // pred_fallthru
        _
      %p133 = scmp.lt.s32.totalorder %s16, 2
      // Predicated region
      $region17: #{tpu_custom_call.1} parent=5 // pred_check
        %p134 = pneg %p133
      $region18: #{tpu_custom_call.1} parent=5 // pred_check_branch
        %136 = sbr.rel (%p134) target = $region20
      $region19: #{tpu_custom_call.1} parent=5 // pred_region
        // Predicated region
        $region21: #{tpu_custom_call.1} parent=19 // pred_check
          %p137 = pneg %p36
        $region22: #{tpu_custom_call.1} parent=19 // pred_check_branch
          %139 = sbr.rel (%p137) target = $region24
        $region23: #{tpu_custom_call.1} parent=19 // pred_region
          %s140 = smul.u32 32, %s16
          %p141 = scmp.lt.s32.totalorder %s140, 63
          %s142 = scalar_select %p141, %s140, 63
          %s143 = smul.addr %s142, 8
          %s144 = scalar_lea.vmem %s0, %s143
          %s145 = smul.u32 32, %s16
        $region24: #{tpu_custom_call.1} parent=19 // pred_fallthru
          _
      $region20: #{tpu_custom_call.1} parent=5 // pred_fallthru
        _
      %p146 = scmp.le.s32.totalorder 1, %s16
      %p147 = scmp.lt.s32.totalorder %s16, 3
      %p148 = pnand %p146, %p147
      %p149 = pneg %p148
      // Predicated region
      $region25: #{tpu_custom_call.1} parent=5 // pred_check
        _
      $region26: #{tpu_custom_call.1} parent=5 // pred_check_branch
        %151 = sbr.rel (%p148) target = $region28
      $region27: #{tpu_custom_call.1} parent=5 // pred_region
        %s152 = ssub.s32 %s16, 1
        %s153 = smul.u32 32, %s21
        %p154 = scmp.lt.s32.totalorder %s153, 63
        %s155 = scalar_select %p154, %s153, 63
        %s156 = smul.addr %s155, 8
        %s157 = scalar_lea.vmem %s0, %s156
        %p158 = pneg %p42
        %p159 = pneg %p39
        %p160 = pneg %p63
        %p161 = pneg %p60
        %p162 = pneg %p89
        %p163 = pneg %p86
        %s164 = sand.u32 %s76, 1
        %s165 = scalar_lea.sflag [#allocation3], %s164
        %s166 = sand.u32 %s76, 1
        %s167 = smul.addr %s166, 256
        %s168 = scalar_lea.vmem [#allocation2], %s167
        %p169 = pneg %p115
        %p170 = pneg %p112
        %s171 = sand.u32 %s102, 1
        %s172 = scalar_lea.sflag [#allocation5], %s171
        %s173 = sand.u32 %s102, 1
        %s174 = smul.addr %s173, 2
        %s175 = scalar_lea.vmem [#allocation4], %s174
        %s176 = smul.u32 32, %s21
        %p177 = scmp.lt.s32.totalorder %s176, 63
        %s178 = scalar_select %p177, %s176, 63
        %s179 = smul.addr %s178, 8
        %s180 = scalar_lea.vmem %s0, %s179
        %s181 = smul.u32 32, %s21
        %s182 = smul.u32 32, %s21
        %v183 = vld [vmem:[%s180] sm:$0xff]
        %v184 = vld [vmem:[%s180 + $0x8] sm:$0xff]
        %v185 = vld [vmem:[%s180 + $0x10] sm:$0xff]
        %v186 = vld [vmem:[%s180 + $0x18] sm:$0xff]
        %v187 = vld [vmem:[%s180 + $0x20] sm:$0xff]
        %v188 = vld [vmem:[%s180 + $0x28] sm:$0xff]
        %v189 = vld [vmem:[%s180 + $0x30] sm:$0xff]
        %v190 = vld [vmem:[%s180 + $0x38] sm:$0xff]
        %v191 = vld [vmem:[%s180 + $0x40] sm:$0xff]
        %v192 = vld [vmem:[%s180 + $0x48] sm:$0xff]
        %v193 = vld [vmem:[%s180 + $0x50] sm:$0xff]
        %v194 = vld [vmem:[%s180 + $0x58] sm:$0xff]
        %v195 = vld [vmem:[%s180 + $0x60] sm:$0xff]
        %v196 = vld [vmem:[%s180 + $0x68] sm:$0xff]
        %v197 = vld [vmem:[%s180 + $0x70] sm:$0xff]
        %v198 = vld [vmem:[%s180 + $0x78] sm:$0xff]
        %v199 = vld [vmem:[%s180 + $0x80] sm:$0xff]
        %v200 = vld [vmem:[%s180 + $0x88] sm:$0xff]
        %v201 = vld [vmem:[%s180 + $0x90] sm:$0xff]
        %v202 = vld [vmem:[%s180 + $0x98] sm:$0xff]
        %v203 = vld [vmem:[%s180 + $0xa0] sm:$0xff]
        %v204 = vld [vmem:[%s180 + $0xa8] sm:$0xff]
        %v205 = vld [vmem:[%s180 + $0xb0] sm:$0xff]
        %v206 = vld [vmem:[%s180 + $0xb8] sm:$0xff]
        %v207 = vld [vmem:[%s180 + $0xc0] sm:$0xff]
        %v208 = vld [vmem:[%s180 + $0xc8] sm:$0xff]
        %v209 = vld [vmem:[%s180 + $0xd0] sm:$0xff]
        %v210 = vld [vmem:[%s180 + $0xd8] sm:$0xff]
        %v211 = vld [vmem:[%s180 + $0xe0] sm:$0xff]
        %v212 = vld [vmem:[%s180 + $0xe8] sm:$0xff]
        %v213 = vld [vmem:[%s180 + $0xf0] sm:$0xff]
        %v214 = vld [vmem:[%s180 + $0xf8] sm:$0xff]
        %v215 = vld [vmem:[%s1] sm:$0xff]
        %v216 = vld [vmem:[%s1 + $0x8] sm:$0xff]
        %v217 = vld [vmem:[%s1 + $0x10] sm:$0xff]
        %v218 = vld [vmem:[%s1 + $0x18] sm:$0xff]
        %v219 = vld [vmem:[%s1 + $0x20] sm:$0xff]
        %vm220 = vcmask 326656
        %v222 = vsel %vm220, %v183, 0
        %v225 = vsel %vm220, %v184, 0
        %v228 = vsel %vm220, %v185, 0
        %v231 = vsel %vm220, %v186, 0
        %v234 = vsel %vm220, %v187, 0
        %v237 = vsel %vm220, %v188, 0
        %v240 = vsel %vm220, %v189, 0
        %v243 = vsel %vm220, %v190, 0
        %v246 = vsel %vm220, %v191, 0
        %v249 = vsel %vm220, %v192, 0
        %v252 = vsel %vm220, %v193, 0
        %v255 = vsel %vm220, %v194, 0
        %v258 = vsel %vm220, %v195, 0
        %v261 = vsel %vm220, %v196, 0
        %v264 = vsel %vm220, %v197, 0
        %v267 = vsel %vm220, %v198, 0
        %v270 = vsel %vm220, %v199, 0
        %v273 = vsel %vm220, %v200, 0
        %v276 = vsel %vm220, %v201, 0
        %v279 = vsel %vm220, %v202, 0
        %v282 = vsel %vm220, %v203, 0
        %v285 = vsel %vm220, %v204, 0
        %v288 = vsel %vm220, %v205, 0
        %v291 = vsel %vm220, %v206, 0
        %v294 = vsel %vm220, %v207, 0
        %v297 = vsel %vm220, %v208, 0
        %v300 = vsel %vm220, %v209, 0
        %v303 = vsel %vm220, %v210, 0
        %v306 = vsel %vm220, %v211, 0
        %v309 = vsel %vm220, %v212, 0
        %v312 = vsel %vm220, %v213, 0
        %v315 = vsel %vm220, %v214, 0
        %317 = vmatprep.subr.mxu0 0.0
        %318 = vmatpush1.msra.mxu0 0.0
        %319 = vmatprep.subr.mxu0 0.0
        %320 = vmatpush1.msra.mxu0 0.0
        %321 = vmatprep.subr.mxu0 0.0
        %322 = vmatpush1.msra.mxu0 0.0
        %323 = vmatprep.subr.mxu0 0.0
        %324 = vmatpush1.msra.mxu0 0.0
        %325 = vmatprep.subr.mxu0 0.0
        %326 = vmatpush1.msra.mxu0 0.0
        %327 = vmatprep.subr.mxu0 0.0
        %328 = vmatpush1.msra.mxu0 0.0
        %329 = vmatprep.subr.mxu0 0.0
        %330 = vmatpush1.msra.mxu0 0.0
        %331 = vmatprep.subr.mxu0 0.0
        %332 = vmatpush1.msra.mxu0 0.0
        %333 = vmatprep.subr.mxu0 0.0
        %334 = vmatpush1.msra.mxu0 0.0
        %335 = vmatprep.subr.mxu0 0.0
        %336 = vmatpush1.msra.mxu0 0.0
        %337 = vmatprep.subr.mxu0 0.0
        %338 = vmatpush1.msra.mxu0 0.0
        %339 = vmatprep.subr.mxu0 0.0
        %340 = vmatpush1.msra.mxu0 %v219
        %341 = vmatprep.subr.mxu0 0.0
        %342 = vmatpush1.msra.mxu0 %v218
        %343 = vmatprep.subr.mxu0 0.0
        %344 = vmatpush1.msra.mxu0 %v217
        %345 = vmatprep.subr.mxu0 0.0
        %346 = vmatpush1.msra.mxu0 %v216
        %347 = vmatprep.subr.mxu0 0.0
        %348 = vmatpush1.msra.mxu0 %v215
        %349 = vmatprep.subr.mxu0 0.0
        %350 = vmatpush2.msra.mxu0 0.0
        %351 = vmatprep.subr.mxu0 0.0
        %352 = vmatpush2.msra.mxu0 0.0
        %353 = vmatprep.subr.mxu0 0.0
        %354 = vmatpush2.msra.mxu0 0.0
        %355 = vmatprep.subr.mxu0 0.0
        %356 = vmatpush2.msra.mxu0 0.0
        %357 = vmatprep.subr.mxu0 0.0
        %358 = vmatpush2.msra.mxu0 0.0
        %359 = vmatprep.subr.mxu0 0.0
        %360 = vmatpush2.msra.mxu0 0.0
        %361 = vmatprep.subr.mxu0 0.0
        %362 = vmatpush2.msra.mxu0 0.0
        %363 = vmatprep.subr.mxu0 0.0
        %364 = vmatpush2.msra.mxu0 0.0
        %365 = vmatprep.subr.mxu0 0.0
        %366 = vmatpush2.msra.mxu0 0.0
        %367 = vmatprep.subr.mxu0 0.0
        %368 = vmatpush2.msra.mxu0 0.0
        %369 = vmatprep.subr.mxu0 0.0
        %370 = vmatpush2.msra.mxu0 0.0
        %371 = vmatprep.subr.mxu0 0.0
        %372 = vmatpush2.msra.mxu0 0.0
        %373 = vmatprep.subr.mxu0 0.0
        %374 = vmatpush2.msra.mxu0 0.0
        %375 = vmatprep.subr.mxu0 0.0
        %376 = vmatpush2.msra.mxu0 0.0
        %377 = vmatprep.subr.mxu0 0.0
        %378 = vmatpush2.msra.mxu0 0.0
        %379 = vmatprep.subr.mxu0 0.0
        %380 = vmatpush2.msra.mxu0 0.0
        %381 = vmatprep.mubr.f32.mxu0 0.0
        %382 = vmatmul.mubr.f32.gmra.mxu0 %v222
        %v383 = vpop.f32.mrf.mxu0
        %v384 = vadd.f32 0.0, %v383
        %v385 = vpop.f32.mrf.mxu0
        %386 = vmatprep.mubr.f32.mxu0 0.0
        %387 = vmatmul.mubr.f32.gmra.mxu0 %v225
        %v388 = vpop.f32.mrf.mxu0
        %v389 = vadd.f32 0.0, %v388
        %v390 = vpop.f32.mrf.mxu0
        %391 = vmatprep.mubr.f32.mxu0 0.0
        %392 = vmatmul.mubr.f32.gmra.mxu0 %v228
        %v393 = vpop.f32.mrf.mxu0
        %v394 = vadd.f32 0.0, %v393
        %v395 = vpop.f32.mrf.mxu0
        %396 = vmatprep.mubr.f32.mxu0 0.0
        %397 = vmatmul.mubr.f32.gmra.mxu0 %v231
        %v398 = vpop.f32.mrf.mxu0
        %v399 = vadd.f32 0.0, %v398
        %v400 = vpop.f32.mrf.mxu0
        %401 = vmatprep.mubr.f32.mxu0 0.0
        %402 = vmatmul.mubr.f32.gmra.mxu0 %v234
        %v403 = vpop.f32.mrf.mxu0
        %v404 = vadd.f32 0.0, %v403
        %v405 = vpop.f32.mrf.mxu0
        %406 = vmatprep.mubr.f32.mxu0 0.0
        %407 = vmatmul.mubr.f32.gmra.mxu0 %v237
        %v408 = vpop.f32.mrf.mxu0
        %v409 = vadd.f32 0.0, %v408
        %v410 = vpop.f32.mrf.mxu0
        %411 = vmatprep.mubr.f32.mxu0 0.0
        %412 = vmatmul.mubr.f32.gmra.mxu0 %v240
        %v413 = vpop.f32.mrf.mxu0
        %v414 = vadd.f32 0.0, %v413
        %v415 = vpop.f32.mrf.mxu0
        %416 = vmatprep.mubr.f32.mxu0 0.0
        %417 = vmatmul.mubr.f32.gmra.mxu0 %v243
        %v418 = vpop.f32.mrf.mxu0
        %v419 = vadd.f32 0.0, %v418
        %v420 = vpop.f32.mrf.mxu0
        %421 = vmatprep.mubr.f32.mxu0 0.0
        %422 = vmatmul.mubr.f32.gmra.mxu0 %v246
        %v423 = vpop.f32.mrf.mxu0
        %v424 = vadd.f32 0.0, %v423
        %v425 = vpop.f32.mrf.mxu0
        %426 = vmatprep.mubr.f32.mxu0 0.0
        %427 = vmatmul.mubr.f32.gmra.mxu0 %v249
        %v428 = vpop.f32.mrf.mxu0
        %v429 = vadd.f32 0.0, %v428
        %v430 = vpop.f32.mrf.mxu0
        %431 = vmatprep.mubr.f32.mxu0 0.0
        %432 = vmatmul.mubr.f32.gmra.mxu0 %v252
        %v433 = vpop.f32.mrf.mxu0
        %v434 = vadd.f32 0.0, %v433
        %v435 = vpop.f32.mrf.mxu0
        %436 = vmatprep.mubr.f32.mxu0 0.0
        %437 = vmatmul.mubr.f32.gmra.mxu0 %v255
        %v438 = vpop.f32.mrf.mxu0
        %v439 = vadd.f32 0.0, %v438
        %v440 = vpop.f32.mrf.mxu0
        %441 = vmatprep.mubr.f32.mxu0 0.0
        %442 = vmatmul.mubr.f32.gmra.mxu0 %v258
        %v443 = vpop.f32.mrf.mxu0
        %v444 = vadd.f32 0.0, %v443
        %v445 = vpop.f32.mrf.mxu0
        %446 = vmatprep.mubr.f32.mxu0 0.0
        %447 = vmatmul.mubr.f32.gmra.mxu0 %v261
        %v448 = vpop.f32.mrf.mxu0
        %v449 = vadd.f32 0.0, %v448
        %v450 = vpop.f32.mrf.mxu0
        %451 = vmatprep.mubr.f32.mxu0 0.0
        %452 = vmatmul.mubr.f32.gmra.mxu0 %v264
        %v453 = vpop.f32.mrf.mxu0
        %v454 = vadd.f32 0.0, %v453
        %v455 = vpop.f32.mrf.mxu0
        %456 = vmatprep.mubr.f32.mxu0 0.0
        %457 = vmatmul.mubr.f32.gmra.mxu0 %v267
        %v458 = vpop.f32.mrf.mxu0
        %v459 = vadd.f32 0.0, %v458
        %v460 = vpop.f32.mrf.mxu0
        %461 = vmatprep.mubr.f32.mxu0 0.0
        %462 = vmatmul.mubr.f32.gmra.mxu0 %v270
        %v463 = vpop.f32.mrf.mxu0
        %v464 = vadd.f32 0.0, %v463
        %v465 = vpop.f32.mrf.mxu0
        %466 = vmatprep.mubr.f32.mxu0 0.0
        %467 = vmatmul.mubr.f32.gmra.mxu0 %v273
        %v468 = vpop.f32.mrf.mxu0
        %v469 = vadd.f32 0.0, %v468
        %v470 = vpop.f32.mrf.mxu0
        %471 = vmatprep.mubr.f32.mxu0 0.0
        %472 = vmatmul.mubr.f32.gmra.mxu0 %v276
        %v473 = vpop.f32.mrf.mxu0
        %v474 = vadd.f32 0.0, %v473
        %v475 = vpop.f32.mrf.mxu0
        %476 = vmatprep.mubr.f32.mxu0 0.0
        %477 = vmatmul.mubr.f32.gmra.mxu0 %v279
        %v478 = vpop.f32.mrf.mxu0
        %v479 = vadd.f32 0.0, %v478
        %v480 = vpop.f32.mrf.mxu0
        %481 = vmatprep.mubr.f32.mxu0 0.0
        %482 = vmatmul.mubr.f32.gmra.mxu0 %v282
        %v483 = vpop.f32.mrf.mxu0
        %v484 = vadd.f32 0.0, %v483
        %v485 = vpop.f32.mrf.mxu0
        %486 = vmatprep.mubr.f32.mxu0 0.0
        %487 = vmatmul.mubr.f32.gmra.mxu0 %v285
        %v488 = vpop.f32.mrf.mxu0
        %v489 = vadd.f32 0.0, %v488
        %v490 = vpop.f32.mrf.mxu0
        %491 = vmatprep.mubr.f32.mxu0 0.0
        %492 = vmatmul.mubr.f32.gmra.mxu0 %v288
        %v493 = vpop.f32.mrf.mxu0
        %v494 = vadd.f32 0.0, %v493
        %v495 = vpop.f32.mrf.mxu0
        %496 = vmatprep.mubr.f32.mxu0 0.0
        %497 = vmatmul.mubr.f32.gmra.mxu0 %v291
        %v498 = vpop.f32.mrf.mxu0
        %v499 = vadd.f32 0.0, %v498
        %v500 = vpop.f32.mrf.mxu0
        %501 = vmatprep.mubr.f32.mxu0 0.0
        %502 = vmatmul.mubr.f32.gmra.mxu0 %v294
        %v503 = vpop.f32.mrf.mxu0
        %v504 = vadd.f32 0.0, %v503
        %v505 = vpop.f32.mrf.mxu0
        %506 = vmatprep.mubr.f32.mxu0 0.0
        %507 = vmatmul.mubr.f32.gmra.mxu0 %v297
        %v508 = vpop.f32.mrf.mxu0
        %v509 = vadd.f32 0.0, %v508
        %v510 = vpop.f32.mrf.mxu0
        %511 = vmatprep.mubr.f32.mxu0 0.0
        %512 = vmatmul.mubr.f32.gmra.mxu0 %v300
        %v513 = vpop.f32.mrf.mxu0
        %v514 = vadd.f32 0.0, %v513
        %v515 = vpop.f32.mrf.mxu0
        %516 = vmatprep.mubr.f32.mxu0 0.0
        %517 = vmatmul.mubr.f32.gmra.mxu0 %v303
        %v518 = vpop.f32.mrf.mxu0
        %v519 = vadd.f32 0.0, %v518
        %v520 = vpop.f32.mrf.mxu0
        %521 = vmatprep.mubr.f32.mxu0 0.0
        %522 = vmatmul.mubr.f32.gmra.mxu0 %v306
        %v523 = vpop.f32.mrf.mxu0
        %v524 = vadd.f32 0.0, %v523
        %v525 = vpop.f32.mrf.mxu0
        %526 = vmatprep.mubr.f32.mxu0 0.0
        %527 = vmatmul.mubr.f32.gmra.mxu0 %v309
        %v528 = vpop.f32.mrf.mxu0
        %v529 = vadd.f32 0.0, %v528
        %v530 = vpop.f32.mrf.mxu0
        %531 = vmatprep.mubr.f32.mxu0 0.0
        %532 = vmatmul.mubr.f32.gmra.mxu0 %v312
        %v533 = vpop.f32.mrf.mxu0
        %v534 = vadd.f32 0.0, %v533
        %v535 = vpop.f32.mrf.mxu0
        %536 = vmatprep.mubr.f32.mxu0 0.0
        %537 = vmatmul.mubr.f32.gmra.mxu0 %v315
        %v538 = vpop.f32.mrf.mxu0
        %v539 = vadd.f32 0.0, %v538
        %v540 = vpop.f32.mrf.mxu0
        %541 = vdwg.mxu0
        %542 = vst [vmem:[%s168] sm:$0xff] %v384
        %543 = vst [vmem:[%s168 + $0x8] sm:$0xff] %v389
        %544 = vst [vmem:[%s168 + $0x10] sm:$0xff] %v394
        %545 = vst [vmem:[%s168 + $0x18] sm:$0xff] %v399
        %546 = vst [vmem:[%s168 + $0x20] sm:$0xff] %v404
        %547 = vst [vmem:[%s168 + $0x28] sm:$0xff] %v409
        %548 = vst [vmem:[%s168 + $0x30] sm:$0xff] %v414
        %549 = vst [vmem:[%s168 + $0x38] sm:$0xff] %v419
        %550 = vst [vmem:[%s168 + $0x40] sm:$0xff] %v424
        %551 = vst [vmem:[%s168 + $0x48] sm:$0xff] %v429
        %552 = vst [vmem:[%s168 + $0x50] sm:$0xff] %v434
        %553 = vst [vmem:[%s168 + $0x58] sm:$0xff] %v439
        %554 = vst [vmem:[%s168 + $0x60] sm:$0xff] %v444
        %555 = vst [vmem:[%s168 + $0x68] sm:$0xff] %v449
        %556 = vst [vmem:[%s168 + $0x70] sm:$0xff] %v454
        %557 = vst [vmem:[%s168 + $0x78] sm:$0xff] %v459
        %558 = vst [vmem:[%s168 + $0x80] sm:$0xff] %v464
        %559 = vst [vmem:[%s168 + $0x88] sm:$0xff] %v469
        %560 = vst [vmem:[%s168 + $0x90] sm:$0xff] %v474
        %561 = vst [vmem:[%s168 + $0x98] sm:$0xff] %v479
        %562 = vst [vmem:[%s168 + $0xa0] sm:$0xff] %v484
        %563 = vst [vmem:[%s168 + $0xa8] sm:$0xff] %v489
        %564 = vst [vmem:[%s168 + $0xb0] sm:$0xff] %v494
        %565 = vst [vmem:[%s168 + $0xb8] sm:$0xff] %v499
        %566 = vst [vmem:[%s168 + $0xc0] sm:$0xff] %v504
        %567 = vst [vmem:[%s168 + $0xc8] sm:$0xff] %v509
        %568 = vst [vmem:[%s168 + $0xd0] sm:$0xff] %v514
        %569 = vst [vmem:[%s168 + $0xd8] sm:$0xff] %v519
        %570 = vst [vmem:[%s168 + $0xe0] sm:$0xff] %v524
        %571 = vst [vmem:[%s168 + $0xe8] sm:$0xff] %v529
        %572 = vst [vmem:[%s168 + $0xf0] sm:$0xff] %v534
        %573 = vst [vmem:[%s168 + $0xf8] sm:$0xff] %v539
        %s574 = smul.u32 %s21, 256
        %s575 = ssub.s32 512, %s574
        %p576 = scmp.lt.s32.totalorder %s575, 256
        %s577 = scalar_select %p576, %s575, 256
        %s578 = scvt.s32.f32 %s577
        %v579 = vstv %s578
        %v580 = vrcp.pop %v579
        %s581 = vtos %v580
        %v582 = vadd.f32 %v384, %v389
        %v583 = vadd.f32 %v582, %v394
        %v584 = vadd.f32 %v583, %v399
        %v585 = vadd.f32 %v584, %v404
        %v586 = vadd.f32 %v585, %v409
        %v587 = vadd.f32 %v586, %v414
        %v588 = vadd.f32 %v587, %v419
        %v589 = vadd.f32 %v588, %v424
        %v590 = vadd.f32 %v589, %v429
        %v591 = vadd.f32 %v590, %v434
        %v592 = vadd.f32 %v591, %v439
        %v593 = vadd.f32 %v592, %v444
        %v594 = vadd.f32 %v593, %v449
        %v595 = vadd.f32 %v594, %v454
        %v596 = vadd.f32 %v595, %v459
        %v597 = vadd.f32 %v596, %v464
        %v598 = vadd.f32 %v597, %v469
        %v599 = vadd.f32 %v598, %v474
        %v600 = vadd.f32 %v599, %v479
        %v601 = vadd.f32 %v600, %v484
        %v602 = vadd.f32 %v601, %v489
        %v603 = vadd.f32 %v602, %v494
        %v604 = vadd.f32 %v603, %v499
        %v605 = vadd.f32 %v604, %v504
        %v606 = vadd.f32 %v605, %v509
        %v607 = vadd.f32 %v606, %v514
        %v608 = vadd.f32 %v607, %v519
        %v609 = vadd.f32 %v608, %v524
        %v610 = vadd.f32 %v609, %v529
        %v611 = vadd.f32 %v610, %v534
        %v612 = vadd.f32 %v611, %v539
        %v613 = vrot.slane %v612, 4
        %v614 = vadd.f32 %v612, %v613
        %v615 = vrot.slane %v614, 2
        %v616 = vadd.f32 %v614, %v615
        %v617 = vrot.slane %v616, 1
        %v618 = vadd.f32 %v616, %v617
        %v619 = vstv %s581
        %v620 = vmul.f32 %v618, %v619
        %v621 = vlaneseq
        %v622 = vshrl.u32 %v621, 7
        %v623 = vadd.s32 %v622, 8
        %v624 = vadd.s32 %v622, 16
        %v625 = vadd.s32 %v622, 24
        %v626 = vadd.s32 %v622, 32
        %v627 = vadd.s32 %v622, 40
        %v628 = vadd.s32 %v622, 48
        %v629 = vadd.s32 %v622, 56
        %v630 = vadd.s32 %v622, 64
        %v631 = vadd.s32 %v622, 72
        %v632 = vadd.s32 %v622, 80
        %v633 = vadd.s32 %v622, 88
        %v634 = vadd.s32 %v622, 96
        %v635 = vadd.s32 %v622, 104
        %v636 = vadd.s32 %v622, 112
        %v637 = vadd.s32 %v622, 120
        %v638 = vadd.s32 %v622, 128
        %v639 = vadd.s32 %v622, 136
        %v640 = vadd.s32 %v622, 144
        %v641 = vadd.s32 %v622, 152
        %v642 = vadd.s32 %v622, 160
        %v643 = vadd.s32 %v622, 168
        %v644 = vadd.s32 %v622, 176
        %v645 = vadd.s32 %v622, 184
        %v646 = vadd.s32 %v622, 192
        %v647 = vadd.s32 %v622, 200
        %v648 = vadd.s32 %v622, 208
        %v649 = vadd.s32 %v622, 216
        %v650 = vadd.s32 %v622, 224
        %v651 = vadd.s32 %v622, 232
        %v652 = vadd.s32 %v622, 240
        %v653 = vadd.s32 %v622, 248
        %v654 = vstv %s577
        %vm655 = vcmp.lt.s32.totalorder %v622, %v654
        %vm656 = vcmp.lt.s32.totalorder %v623, %v654
        %vm657 = vcmp.lt.s32.totalorder %v624, %v654
        %vm658 = vcmp.lt.s32.totalorder %v625, %v654
        %vm659 = vcmp.lt.s32.totalorder %v626, %v654
        %vm660 = vcmp.lt.s32.totalorder %v627, %v654
        %vm661 = vcmp.lt.s32.totalorder %v628, %v654
        %vm662 = vcmp.lt.s32.totalorder %v629, %v654
        %vm663 = vcmp.lt.s32.totalorder %v630, %v654
        %vm664 = vcmp.lt.s32.totalorder %v631, %v654
        %vm665 = vcmp.lt.s32.totalorder %v632, %v654
        %vm666 = vcmp.lt.s32.totalorder %v633, %v654
        %vm667 = vcmp.lt.s32.totalorder %v634, %v654
        %vm668 = vcmp.lt.s32.totalorder %v635, %v654
        %vm669 = vcmp.lt.s32.totalorder %v636, %v654
        %vm670 = vcmp.lt.s32.totalorder %v637, %v654
        %vm671 = vcmp.lt.s32.totalorder %v638, %v654
        %vm672 = vcmp.lt.s32.totalorder %v639, %v654
        %vm673 = vcmp.lt.s32.totalorder %v640, %v654
        %vm674 = vcmp.lt.s32.totalorder %v641, %v654
        %vm675 = vcmp.lt.s32.totalorder %v642, %v654
        %vm676 = vcmp.lt.s32.totalorder %v643, %v654
        %vm677 = vcmp.lt.s32.totalorder %v644, %v654
        %vm678 = vcmp.lt.s32.totalorder %v645, %v654
        %vm679 = vcmp.lt.s32.totalorder %v646, %v654
        %vm680 = vcmp.lt.s32.totalorder %v647, %v654
        %vm681 = vcmp.lt.s32.totalorder %v648, %v654
        %vm682 = vcmp.lt.s32.totalorder %v649, %v654
        %vm683 = vcmp.lt.s32.totalorder %v650, %v654
        %vm684 = vcmp.lt.s32.totalorder %v651, %v654
        %vm685 = vcmp.lt.s32.totalorder %v652, %v654
        %vm686 = vcmp.lt.s32.totalorder %v653, %v654
        %v687 = vsel %vm655, 1, 0
        %v688 = vsel %vm656, 1, 0
        %v689 = vsel %vm657, 1, 0
        %v690 = vsel %vm658, 1, 0
        %v691 = vsel %vm659, 1, 0
        %v692 = vsel %vm660, 1, 0
        %v693 = vsel %vm661, 1, 0
        %v694 = vsel %vm662, 1, 0
        %v695 = vsel %vm663, 1, 0
        %v696 = vsel %vm664, 1, 0
        %v697 = vsel %vm665, 1, 0
        %v698 = vsel %vm666, 1, 0
        %v699 = vsel %vm667, 1, 0
        %v700 = vsel %vm668, 1, 0
        %v701 = vsel %vm669, 1, 0
        %v702 = vsel %vm670, 1, 0
        %v703 = vsel %vm671, 1, 0
        %v704 = vsel %vm672, 1, 0
        %v705 = vsel %vm673, 1, 0
        %v706 = vsel %vm674, 1, 0
        %v707 = vsel %vm675, 1, 0
        %v708 = vsel %vm676, 1, 0
        %v709 = vsel %vm677, 1, 0
        %v710 = vsel %vm678, 1, 0
        %v711 = vsel %vm679, 1, 0
        %v712 = vsel %vm680, 1, 0
        %v713 = vsel %vm681, 1, 0
        %v714 = vsel %vm682, 1, 0
        %v715 = vsel %vm683, 1, 0
        %v716 = vsel %vm684, 1, 0
        %v717 = vsel %vm685, 1, 0
        %v718 = vsel %vm686, 1, 0
        %v719 = vcvt.s32.f32 %v687
        %v720 = vcvt.s32.f32 %v688
        %v721 = vcvt.s32.f32 %v689
        %v722 = vcvt.s32.f32 %v690
        %v723 = vcvt.s32.f32 %v691
        %v724 = vcvt.s32.f32 %v692
        %v725 = vcvt.s32.f32 %v693
        %v726 = vcvt.s32.f32 %v694
        %v727 = vcvt.s32.f32 %v695
        %v728 = vcvt.s32.f32 %v696
        %v729 = vcvt.s32.f32 %v697
        %v730 = vcvt.s32.f32 %v698
        %v731 = vcvt.s32.f32 %v699
        %v732 = vcvt.s32.f32 %v700
        %v733 = vcvt.s32.f32 %v701
        %v734 = vcvt.s32.f32 %v702
        %v735 = vcvt.s32.f32 %v703
        %v736 = vcvt.s32.f32 %v704
        %v737 = vcvt.s32.f32 %v705
        %v738 = vcvt.s32.f32 %v706
        %v739 = vcvt.s32.f32 %v707
        %v740 = vcvt.s32.f32 %v708
        %v741 = vcvt.s32.f32 %v709
        %v742 = vcvt.s32.f32 %v710
        %v743 = vcvt.s32.f32 %v711
        %v744 = vcvt.s32.f32 %v712
        %v745 = vcvt.s32.f32 %v713
        %v746 = vcvt.s32.f32 %v714
        %v747 = vcvt.s32.f32 %v715
        %v748 = vcvt.s32.f32 %v716
        %v749 = vcvt.s32.f32 %v717
        %v750 = vcvt.s32.f32 %v718
        %v751 = vsub.f32 %v384, %v620
        %v752 = vsub.f32 %v389, %v620
        %v753 = vsub.f32 %v394, %v620
        %v754 = vsub.f32 %v399, %v620
        %v755 = vsub.f32 %v404, %v620
        %v756 = vsub.f32 %v409, %v620
        %v757 = vsub.f32 %v414, %v620
        %v758 = vsub.f32 %v419, %v620
        %v759 = vsub.f32 %v424, %v620
        %v760 = vsub.f32 %v429, %v620
        %v761 = vsub.f32 %v434, %v620
        %v762 = vsub.f32 %v439, %v620
        %v763 = vsub.f32 %v444, %v620
        %v764 = vsub.f32 %v449, %v620
        %v765 = vsub.f32 %v454, %v620
        %v766 = vsub.f32 %v459, %v620
        %v767 = vsub.f32 %v464, %v620
        %v768 = vsub.f32 %v469, %v620
        %v769 = vsub.f32 %v474, %v620
        %v770 = vsub.f32 %v479, %v620
        %v771 = vsub.f32 %v484, %v620
        %v772 = vsub.f32 %v489, %v620
        %v773 = vsub.f32 %v494, %v620
        %v774 = vsub.f32 %v499, %v620
        %v775 = vsub.f32 %v504, %v620
        %v776 = vsub.f32 %v509, %v620
        %v777 = vsub.f32 %v514, %v620
        %v778 = vsub.f32 %v519, %v620
        %v779 = vsub.f32 %v524, %v620
        %v780 = vsub.f32 %v529, %v620
        %v781 = vsub.f32 %v534, %v620
        %v782 = vsub.f32 %v539, %v620
        %v783 = vmul.f32 %v751, %v719
        %v784 = vmul.f32 %v752, %v720
        %v785 = vmul.f32 %v753, %v721
        %v786 = vmul.f32 %v754, %v722
        %v787 = vmul.f32 %v755, %v723
        %v788 = vmul.f32 %v756, %v724
        %v789 = vmul.f32 %v757, %v725
        %v790 = vmul.f32 %v758, %v726
        %v791 = vmul.f32 %v759, %v727
        %v792 = vmul.f32 %v760, %v728
        %v793 = vmul.f32 %v761, %v729
        %v794 = vmul.f32 %v762, %v730
        %v795 = vmul.f32 %v763, %v731
        %v796 = vmul.f32 %v764, %v732
        %v797 = vmul.f32 %v765, %v733
        %v798 = vmul.f32 %v766, %v734
        %v799 = vmul.f32 %v767, %v735
        %v800 = vmul.f32 %v768, %v736
        %v801 = vmul.f32 %v769, %v737
        %v802 = vmul.f32 %v770, %v738
        %v803 = vmul.f32 %v771, %v739
        %v804 = vmul.f32 %v772, %v740
        %v805 = vmul.f32 %v773, %v741
        %v806 = vmul.f32 %v774, %v742
        %v807 = vmul.f32 %v775, %v743
        %v808 = vmul.f32 %v776, %v744
        %v809 = vmul.f32 %v777, %v745
        %v810 = vmul.f32 %v778, %v746
        %v811 = vmul.f32 %v779, %v747
        %v812 = vmul.f32 %v780, %v748
        %v813 = vmul.f32 %v781, %v749
        %v814 = vmul.f32 %v782, %v750
        %v815 = vmul.f32 %v783, %v783
        %v816 = vmul.f32 %v784, %v784
        %v817 = vmul.f32 %v785, %v785
        %v818 = vmul.f32 %v786, %v786
        %v819 = vmul.f32 %v787, %v787
        %v820 = vmul.f32 %v788, %v788
        %v821 = vmul.f32 %v789, %v789
        %v822 = vmul.f32 %v790, %v790
        %v823 = vmul.f32 %v791, %v791
        %v824 = vmul.f32 %v792, %v792
        %v825 = vmul.f32 %v793, %v793
        %v826 = vmul.f32 %v794, %v794
        %v827 = vmul.f32 %v795, %v795
        %v828 = vmul.f32 %v796, %v796
        %v829 = vmul.f32 %v797, %v797
        %v830 = vmul.f32 %v798, %v798
        %v831 = vmul.f32 %v799, %v799
        %v832 = vmul.f32 %v800, %v800
        %v833 = vmul.f32 %v801, %v801
        %v834 = vmul.f32 %v802, %v802
        %v835 = vmul.f32 %v803, %v803
        %v836 = vmul.f32 %v804, %v804
        %v837 = vmul.f32 %v805, %v805
        %v838 = vmul.f32 %v806, %v806
        %v839 = vmul.f32 %v807, %v807
        %v840 = vmul.f32 %v808, %v808
        %v841 = vmul.f32 %v809, %v809
        %v842 = vmul.f32 %v810, %v810
        %v843 = vmul.f32 %v811, %v811
        %v844 = vmul.f32 %v812, %v812
        %v845 = vmul.f32 %v813, %v813
        %v846 = vmul.f32 %v814, %v814
        %v847 = vadd.f32 %v815, %v816
        %v848 = vadd.f32 %v847, %v817
        %v849 = vadd.f32 %v848, %v818
        %v850 = vadd.f32 %v849, %v819
        %v851 = vadd.f32 %v850, %v820
        %v852 = vadd.f32 %v851, %v821
        %v853 = vadd.f32 %v852, %v822
        %v854 = vadd.f32 %v853, %v823
        %v855 = vadd.f32 %v854, %v824
        %v856 = vadd.f32 %v855, %v825
        %v857 = vadd.f32 %v856, %v826
        %v858 = vadd.f32 %v857, %v827
        %v859 = vadd.f32 %v858, %v828
        %v860 = vadd.f32 %v859, %v829
        %v861 = vadd.f32 %v860, %v830
        %v862 = vadd.f32 %v861, %v831
        %v863 = vadd.f32 %v862, %v832
        %v864 = vadd.f32 %v863, %v833
        %v865 = vadd.f32 %v864, %v834
        %v866 = vadd.f32 %v865, %v835
        %v867 = vadd.f32 %v866, %v836
        %v868 = vadd.f32 %v867, %v837
        %v869 = vadd.f32 %v868, %v838
        %v870 = vadd.f32 %v869, %v839
        %v871 = vadd.f32 %v870, %v840
        %v872 = vadd.f32 %v871, %v841
        %v873 = vadd.f32 %v872, %v842
        %v874 = vadd.f32 %v873, %v843
        %v875 = vadd.f32 %v874, %v844
        %v876 = vadd.f32 %v875, %v845
        %v877 = vadd.f32 %v876, %v846
        %v878 = vrot.slane %v877, 4
        %v879 = vadd.f32 %v877, %v878
        %v880 = vrot.slane %v879, 2
        %v881 = vadd.f32 %v879, %v880
        %v882 = vrot.slane %v881, 1
        %v883 = vadd.f32 %v881, %v882
        %884 = vst [vmem:[%s175] sm:$0x1] %v620
        %885 = vst [vmem:[%s175 + $0x1] sm:$0x1] %v883
        %s886 = sand.u32 %s76, 1
        %s887 = scalar_lea.sflag [#allocation3], %s886
        %s888 = sand.u32 %s76, 1
        %s889 = smul.addr %s888, 256
        %s890 = scalar_lea.vmem [#allocation2], %s889
        %s891 = sand.u32 %s102, 1
        %s892 = scalar_lea.sflag [#allocation5], %s891
        %s893 = sand.u32 %s102, 1
        %s894 = smul.addr %s893, 2
        %s895 = scalar_lea.vmem [#allocation4], %s894
        // Predicated region
        $region29: #{tpu_custom_call.1} parent=27 // pred_check
          %p896 = pneg %p86
        $region30: #{tpu_custom_call.1} parent=27 // pred_check_branch
          %898 = sbr.rel (%p896) target = $region32
        $region31: #{tpu_custom_call.1} parent=27 // pred_region
          %s899 = smul.u32 32, %s21
          %s901 = ssub.s32 4096, 4096
          %902 = vsyncadd %s887, %s901
          %s903 = smul.addr %s899, 128
          %s904 = scalar_lea.hbm %s2, %s903
          %s905 = sshll.u32 %s890, 4
          %s906 = int_to_ptr.vmem [resolvable:$true] %s905
          %911 = dma.vmem_to_hbm [thread:$0]  %s906, 4096, %s904, %s887, 128, 128, 8
        $region32: #{tpu_custom_call.1} parent=27 // pred_fallthru
          _
        // Predicated region
        $region33: #{tpu_custom_call.1} parent=27 // pred_check
          %p912 = pneg %p112
        $region34: #{tpu_custom_call.1} parent=27 // pred_check_branch
          %914 = sbr.rel (%p912) target = $region36
        $region35: #{tpu_custom_call.1} parent=27 // pred_region
          %s916 = ssub.s32 32, 32
          %917 = vsyncadd %s892, %s916
          %s918 = smul.addr %s21, 32
          %s919 = scalar_lea.hbm %s3, %s918
          %s921 = sshll.u32 %s895, 4
          %s922 = int_to_ptr.vmem [resolvable:$true] %s921
          %924 = dma.vmem_to_hbm [thread:$0]  %s922, 32, %s919, %s892
        $region36: #{tpu_custom_call.1} parent=27 // pred_fallthru
          _
      $region28: #{tpu_custom_call.1} parent=5 // pred_fallthru
        _
      %p925 = scmp.le.s32.totalorder 2, %s16
      // Predicated region
      $region37: #{tpu_custom_call.1} parent=5 // pred_check
        %p926 = pneg %p925
      $region38: #{tpu_custom_call.1} parent=5 // pred_check_branch
        %928 = sbr.rel (%p926) target = $region40
      $region39: #{tpu_custom_call.1} parent=5 // pred_region
        %s929 = ssub.s32 %s16, 2
        // Predicated region
        $region41: #{tpu_custom_call.1} parent=39 // pred_check
          %p930 = pneg %p92
        $region42: #{tpu_custom_call.1} parent=39 // pred_check_branch
          %932 = sbr.rel (%p930) target = $region44
        $region43: #{tpu_custom_call.1} parent=39 // pred_region
          %s933 = sand.u32 %s77, 1
          %s934 = scalar_lea.sflag [#allocation3], %s933
          %s935 = sand.u32 %s77, 1
          %s936 = smul.addr %s935, 256
          %s937 = scalar_lea.vmem [#allocation2], %s936
          %938 = dma.done %s934, 4096
        $region44: #{tpu_custom_call.1} parent=39 // pred_fallthru
          _
        // Predicated region
        $region45: #{tpu_custom_call.1} parent=39 // pred_check
          %p939 = pneg %p118
        $region46: #{tpu_custom_call.1} parent=39 // pred_check_branch
          %941 = sbr.rel (%p939) target = $region48
        $region47: #{tpu_custom_call.1} parent=39 // pred_region
          %s942 = sand.u32 %s103, 1
          %s943 = scalar_lea.sflag [#allocation5], %s942
          %s944 = sand.u32 %s103, 1
          %s945 = smul.addr %s944, 2
          %s946 = scalar_lea.vmem [#allocation4], %s945
          %947 = dma.done %s943, 32
        $region48: #{tpu_custom_call.1} parent=39 // pred_fallthru
          _
      $region40: #{tpu_custom_call.1} parent=5 // pred_fallthru
        _
    $region6: #{tpu_custom_call.1} parent=1 // loop_footer
      %s20 = sadd.s32 1, %s16
    $region7: #{tpu_custom_call.1} parent=1 // loop_footer_branch
      %15 = sbr.rel target = $region3
    $region8: #{tpu_custom_call.1} parent=1 // loop_exit
      _
    %948 = vsyncpa [#allocation3], 1
    %s949 = scalar_lea.sflag [#allocation3], 1
    %950 = vsyncpa %s949, 1
    %951 = vsyncpa [#allocation5], 1
    %s952 = scalar_lea.sflag [#allocation5], 1
    %953 = vsyncpa %s952, 1

// kernel: tpu_custom_call.1
$region0: #{tpu_custom_call.1}
  #allocation0 [shape = 'u32[]', space=smem, size = 0x4, offset = 0x4, fixed_abs, tag = 'smem constant byte address 0x4 - core index']
  #allocation1 [shape = 'u32[144,128]{1,0:T(1,128)}', space=vmem, size = 0x12000, scoped, tag = 'internal scratch']
  %s0 = inlined_call_operand.vmem [shape: f32[512,40], index: 0, kind: input, shape index: {}]
  %s1 = inlined_call_operand.vmem [shape: f32[40,128], index: 1, kind: input, shape index: {}]
  %s2 = inlined_call_operand.hbm [shape: f32[512,128], index: 2, kind: output, shape index: {0}]
  %s3 = inlined_call_operand.hbm [shape: f32[2,2,128], index: 3, kind: output, shape index: {1}]
  %4 = xla_tuple %s2, %s3
  %s5 = sld [smem:[#allocation0]]
  $region49: #{tpu_custom_call.1} parent=0
    _
  %s7 = ssub.s32 1, %s5
  %s8 = scalar_select 0, %s7, %s5
  $region1: #{tpu_custom_call.1} parent=0
    #allocation2 [shape = 'u8[262144]{0}', space=vmem, size = 0x40000, scoped, tag = 'output window, operand 0']
    #allocation3 [shape = 's32[2]{0}', space=sflag, size = 0x8, scoped, tag = 'scoped memory for tpu_custom_call.1']
    #allocation4 [shape = 'u8[2048]{0}', space=vmem, size = 0x800, scoped, tag = 'output window, operand 1']
    #allocation5 [shape = 's32[2]{0}', space=sflag, size = 0x8, scoped, tag = 'scoped memory for tpu_custom_call.1']
    %9 = vsyncpa [#allocation3], 0
    %s10 = scalar_lea.sflag [#allocation3], 1
    %11 = vsyncpa %s10, 0
    %12 = vsyncpa [#allocation5], 0
    %s13 = scalar_lea.sflag [#allocation5], 1
    %14 = vsyncpa %s13, 0
    loop: start=0, step=1, limit=4
    $region2: #{tpu_custom_call.1} parent=1 // loop_pre_header
      _
    $region3: #{tpu_custom_call.1} parent=1 // loop_header
      %s16 = sphi 0, %s20
      %p17 = scmp.ge.s32.totalorder %s16, 4
      %s26 = sphi 0, %s28
      %s29 = sphi 0, %s26
      %s30 = sphi 0, %s29
      %s46 = sphi 0, %s30
      %s50 = sphi 0, %s50
      %s52 = sphi 0, %s50
      %s53 = sphi 0, %s52
      %s67 = sphi 0, %s53
      %s73 = sphi 0, %s75
      %s76 = sphi 0, %s73
      %s77 = sphi 0, %s76
      %s93 = sphi 0, %s77
      %s99 = sphi 0, %s101
      %s102 = sphi 0, %s99
      %s103 = sphi 0, %s102
      %s119 = sphi 0, %s103
    $region4: #{tpu_custom_call.1} parent=1 // loop_header_branch
      %19 = sbr.rel (%p17) target = $region8
    $region5: #{tpu_custom_call.1} parent=1 // loop_body
      %s21 = ssub.s32 %s16, 1
      %s22 = ssub.s32 %s16, 2
      %s23 = sadd.s32 %s16, 1
      %s24 = ssub.s32 %s16, %s23
      %p25 = scmp.eq.s32.totalorder %s24, 0
      %s27 = sadd.s32 %s26, 1
      %s28 = scalar_select %p25, %s26, %s27
      %p31 = pneg %p25
      %p32 = scmp.eq.s32.totalorder %s16, 1
      %p33 = por %p31, %p32
      %p34 = scmp.ne.s32.totalorder %s26, %s29
      %p35 = scmp.eq.s32.totalorder %s16, 0
      %p36 = por %p34, %p35
      %p37 = scmp.ne.s32.totalorder %s26, %s29
      %p38 = scmp.eq.s32.totalorder %s21, 1
      %p39 = por %p37, %p38
      %p40 = scmp.ne.s32.totalorder %s29, %s30
      %p41 = scmp.eq.s32.totalorder %s21, 0
      %p42 = por %p40, %p41
      %p43 = scmp.ne.s32.totalorder %s29, %s30
      %p44 = scmp.eq.s32.totalorder %s22, 1
      %p45 = por %p43, %p44
      %p47 = scmp.ne.s32.totalorder %s30, %s46
      %p48 = scmp.eq.s32.totalorder %s22, 0
      %p49 = por %p47, %p48
      %s51 = sadd.s32 %s50, 1
      %p54 = scmp.eq.s32.totalorder %s16, 1
      %p55 = scmp.ne.s32.totalorder %s50, %s52
      %p56 = scmp.eq.s32.totalorder %s16, 0
      %p57 = por %p55, %p56
      %p58 = scmp.ne.s32.totalorder %s50, %s52
      %p59 = scmp.eq.s32.totalorder %s21, 1
      %p60 = por %p58, %p59
      %p61 = scmp.ne.s32.totalorder %s52, %s53
      %p62 = scmp.eq.s32.totalorder %s21, 0
      %p63 = por %p61, %p62
      %p64 = scmp.ne.s32.totalorder %s52, %s53
      %p65 = scmp.eq.s32.totalorder %s22, 1
      %p66 = por %p64, %p65
      %p68 = scmp.ne.s32.totalorder %s53, %s67
      %p69 = scmp.eq.s32.totalorder %s22, 0
      %p70 = por %p68, %p69
      %s71 = ssub.s32 %s16, %s23
      %p72 = scmp.eq.s32.totalorder %s71, 0
      %s74 = sadd.s32 %s73, 1
      %s75 = scalar_select %p72, %s73, %s74
      %p78 = pneg %p72
      %p79 = scmp.eq.s32.totalorder %s16, 1
      %p80 = por %p78, %p79
      %p81 = scmp.ne.s32.totalorder %s73, %s76
      %p82 = scmp.eq.s32.totalorder %s16, 0
      %p83 = por %p81, %p82
      %p84 = scmp.ne.s32.totalorder %s73, %s76
      %p85 = scmp.eq.s32.totalorder %s21, 1
      %p86 = por %p84, %p85
      %p87 = scmp.ne.s32.totalorder %s76, %s77
      %p88 = scmp.eq.s32.totalorder %s21, 0
      %p89 = por %p87, %p88
      %p90 = scmp.ne.s32.totalorder %s76, %s77
      %p91 = scmp.eq.s32.totalorder %s22, 1
      %p92 = por %p90, %p91
      %p94 = scmp.ne.s32.totalorder %s77, %s93
      %p95 = scmp.eq.s32.totalorder %s22, 0
      %p96 = por %p94, %p95
      %s97 = ssub.s32 %s16, %s23
      %p98 = scmp.eq.s32.totalorder %s97, 0
      %s100 = sadd.s32 %s99, 1
      %s101 = scalar_select %p98, %s99, %s100
      %p104 = pneg %p98
      %p105 = scmp.eq.s32.totalorder %s16, 1
      %p106 = por %p104, %p105
      %p107 = scmp.ne.s32.totalorder %s99, %s102
      %p108 = scmp.eq.s32.totalorder %s16, 0
      %p109 = por %p107, %p108
      %p110 = scmp.ne.s32.totalorder %s99, %s102
      %p111 = scmp.eq.s32.totalorder %s21, 1
      %p112 = por %p110, %p111
      %p113 = scmp.ne.s32.totalorder %s102, %s103
      %p114 = scmp.eq.s32.totalorder %s21, 0
      %p115 = por %p113, %p114
      %p116 = scmp.ne.s32.totalorder %s102, %s103
      %p117 = scmp.eq.s32.totalorder %s22, 1
      %p118 = por %p116, %p117
      %p120 = scmp.ne.s32.totalorder %s103, %s119
      %p121 = scmp.eq.s32.totalorder %s22, 0
      %p122 = por %p120, %p121
      %p123 = scmp.le.s32.totalorder 1, %s16
      %p124 = scmp.lt.s32.totalorder %s16, 3
      %p125 = pnand %p123, %p124
      %p126 = pneg %p125
      // Predicated region
      $region9: #{tpu_custom_call.1} parent=5 // pred_check
        _
      $region10: #{tpu_custom_call.1} parent=5 // pred_check_branch
        %128 = sbr.rel (%p125) target = $region12
      $region11: #{tpu_custom_call.1} parent=5 // pred_region
        %s129 = ssub.s32 %s16, 1
        // Predicated region
        $region13: #{tpu_custom_call.1} parent=11 // pred_check
          %p130 = pneg %p63
        $region14: #{tpu_custom_call.1} parent=11 // pred_check_branch
          %132 = sbr.rel (%p130) target = $region16
        $region15: #{tpu_custom_call.1} parent=11 // pred_region
          _
        $region16: #{tpu_custom_call.1} parent=11 // pred_fallthru
          _
      $region12: #{tpu_custom_call.1} parent=5 // pred_fallthru
        _
      %p133 = scmp.lt.s32.totalorder %s16, 2
      // Predicated region
      $region17: #{tpu_custom_call.1} parent=5 // pred_check
        %p134 = pneg %p133
      $region18: #{tpu_custom_call.1} parent=5 // pred_check_branch
        %136 = sbr.rel (%p134) target = $region20
      $region19: #{tpu_custom_call.1} parent=5 // pred_region
        // Predicated region
        $region21: #{tpu_custom_call.1} parent=19 // pred_check
          %p137 = pneg %p36
        $region22: #{tpu_custom_call.1} parent=19 // pred_check_branch
          %139 = sbr.rel (%p137) target = $region24
        $region23: #{tpu_custom_call.1} parent=19 // pred_region
          %s140 = smul.u32 32, %s16
          %p141 = scmp.lt.s32.totalorder %s140, 63
          %s142 = scalar_select %p141, %s140, 63
          %s143 = smul.addr %s142, 8
          %s144 = scalar_lea.vmem %s0, %s143
          %s145 = smul.u32 32, %s16
        $region24: #{tpu_custom_call.1} parent=19 // pred_fallthru
          _
      $region20: #{tpu_custom_call.1} parent=5 // pred_fallthru
        _
      %p146 = scmp.le.s32.totalorder 1, %s16
      %p147 = scmp.lt.s32.totalorder %s16, 3
      %p148 = pnand %p146, %p147
      %p149 = pneg %p148
      // Predicated region
      $region25: #{tpu_custom_call.1} parent=5 // pred_check
        _
      $region26: #{tpu_custom_call.1} parent=5 // pred_check_branch
        %151 = sbr.rel (%p148) target = $region28
      $region27: #{tpu_custom_call.1} parent=5 // pred_region
        %s152 = ssub.s32 %s16, 1
        %s153 = smul.u32 32, %s21
        %p154 = scmp.lt.s32.totalorder %s153, 63
        %s155 = scalar_select %p154, %s153, 63
        %s156 = smul.addr %s155, 8
        %s157 = scalar_lea.vmem %s0, %s156
        %p158 = pneg %p42
        %p159 = pneg %p39
        %p160 = pneg %p63
        %p161 = pneg %p60
        %p162 = pneg %p89
        %p163 = pneg %p86
        %s164 = sand.u32 %s76, 1
        %s165 = scalar_lea.sflag [#allocation3], %s164
        %s166 = sand.u32 %s76, 1
        %s167 = smul.addr %s166, 256
        %s168 = scalar_lea.vmem [#allocation2], %s167
        %p169 = pneg %p115
        %p170 = pneg %p112
        %s171 = sand.u32 %s102, 1
        %s172 = scalar_lea.sflag [#allocation5], %s171
        %s173 = sand.u32 %s102, 1
        %s174 = smul.addr %s173, 2
        %s175 = scalar_lea.vmem [#allocation4], %s174
        %s176 = smul.u32 32, %s21
        %p177 = scmp.lt.s32.totalorder %s176, 63
        %s178 = scalar_select %p177, %s176, 63
        %s179 = smul.addr %s178, 8
        %s180 = scalar_lea.vmem %s0, %s179
        %s181 = smul.u32 32, %s21
        %s182 = smul.u32 32, %s21
        %v183 = vld [vmem:[%s180] sm:$0xff]
        %v184 = vld [vmem:[%s180 + $0x8] sm:$0xff]
        %v185 = vld [vmem:[%s180 + $0x10] sm:$0xff]
        %v186 = vld [vmem:[%s180 + $0x18] sm:$0xff]
        %v187 = vld [vmem:[%s180 + $0x20] sm:$0xff]
        %v188 = vld [vmem:[%s180 + $0x28] sm:$0xff]
        %v189 = vld [vmem:[%s180 + $0x30] sm:$0xff]
        %v190 = vld [vmem:[%s180 + $0x38] sm:$0xff]
        %v191 = vld [vmem:[%s180 + $0x40] sm:$0xff]
        %v192 = vld [vmem:[%s180 + $0x48] sm:$0xff]
        %v193 = vld [vmem:[%s180 + $0x50] sm:$0xff]
        %v194 = vld [vmem:[%s180 + $0x58] sm:$0xff]
        %v195 = vld [vmem:[%s180 + $0x60] sm:$0xff]
        %v196 = vld [vmem:[%s180 + $0x68] sm:$0xff]
        %v197 = vld [vmem:[%s180 + $0x70] sm:$0xff]
        %v198 = vld [vmem:[%s180 + $0x78] sm:$0xff]
        %v199 = vld [vmem:[%s180 + $0x80] sm:$0xff]
        %v200 = vld [vmem:[%s180 + $0x88] sm:$0xff]
        %v201 = vld [vmem:[%s180 + $0x90] sm:$0xff]
        %v202 = vld [vmem:[%s180 + $0x98] sm:$0xff]
        %v203 = vld [vmem:[%s180 + $0xa0] sm:$0xff]
        %v204 = vld [vmem:[%s180 + $0xa8] sm:$0xff]
        %v205 = vld [vmem:[%s180 + $0xb0] sm:$0xff]
        %v206 = vld [vmem:[%s180 + $0xb8] sm:$0xff]
        %v207 = vld [vmem:[%s180 + $0xc0] sm:$0xff]
        %v208 = vld [vmem:[%s180 + $0xc8] sm:$0xff]
        %v209 = vld [vmem:[%s180 + $0xd0] sm:$0xff]
        %v210 = vld [vmem:[%s180 + $0xd8] sm:$0xff]
        %v211 = vld [vmem:[%s180 + $0xe0] sm:$0xff]
        %v212 = vld [vmem:[%s180 + $0xe8] sm:$0xff]
        %v213 = vld [vmem:[%s180 + $0xf0] sm:$0xff]
        %v214 = vld [vmem:[%s180 + $0xf8] sm:$0xff]
        %v215 = vld [vmem:[%s1] sm:$0xff]
        %v216 = vld [vmem:[%s1 + $0x8] sm:$0xff]
        %v217 = vld [vmem:[%s1 + $0x10] sm:$0xff]
        %v218 = vld [vmem:[%s1 + $0x18] sm:$0xff]
        %v219 = vld [vmem:[%s1 + $0x20] sm:$0xff]
        %vm220 = vcmask 326656
        %v222 = vsel %vm220, %v183, 0
        %v225 = vsel %vm220, %v184, 0
        %v228 = vsel %vm220, %v185, 0
        %v231 = vsel %vm220, %v186, 0
        %v234 = vsel %vm220, %v187, 0
        %v237 = vsel %vm220, %v188, 0
        %v240 = vsel %vm220, %v189, 0
        %v243 = vsel %vm220, %v190, 0
        %v246 = vsel %vm220, %v191, 0
        %v249 = vsel %vm220, %v192, 0
        %v252 = vsel %vm220, %v193, 0
        %v255 = vsel %vm220, %v194, 0
        %v258 = vsel %vm220, %v195, 0
        %v261 = vsel %vm220, %v196, 0
        %v264 = vsel %vm220, %v197, 0
        %v267 = vsel %vm220, %v198, 0
        %v270 = vsel %vm220, %v199, 0
        %v273 = vsel %vm220, %v200, 0
        %v276 = vsel %vm220, %v201, 0
        %v279 = vsel %vm220, %v202, 0
        %v282 = vsel %vm220, %v203, 0
        %v285 = vsel %vm220, %v204, 0
        %v288 = vsel %vm220, %v205, 0
        %v291 = vsel %vm220, %v206, 0
        %v294 = vsel %vm220, %v207, 0
        %v297 = vsel %vm220, %v208, 0
        %v300 = vsel %vm220, %v209, 0
        %v303 = vsel %vm220, %v210, 0
        %v306 = vsel %vm220, %v211, 0
        %v309 = vsel %vm220, %v212, 0
        %v312 = vsel %vm220, %v213, 0
        %v315 = vsel %vm220, %v214, 0
        %317 = vmatprep.subr.mxu0 0.0
        %318 = vmatpush1.msra.mxu0 0.0
        %319 = vmatprep.subr.mxu0 0.0
        %320 = vmatpush1.msra.mxu0 0.0
        %321 = vmatprep.subr.mxu0 0.0
        %322 = vmatpush1.msra.mxu0 0.0
        %323 = vmatprep.subr.mxu0 0.0
        %324 = vmatpush1.msra.mxu0 0.0
        %325 = vmatprep.subr.mxu0 0.0
        %326 = vmatpush1.msra.mxu0 0.0
        %327 = vmatprep.subr.mxu0 0.0
        %328 = vmatpush1.msra.mxu0 0.0
        %329 = vmatprep.subr.mxu0 0.0
        %330 = vmatpush1.msra.mxu0 0.0
        %331 = vmatprep.subr.mxu0 0.0
        %332 = vmatpush1.msra.mxu0 0.0
        %333 = vmatprep.subr.mxu0 0.0
        %334 = vmatpush1.msra.mxu0 0.0
        %335 = vmatprep.subr.mxu0 0.0
        %336 = vmatpush1.msra.mxu0 0.0
        %337 = vmatprep.subr.mxu0 0.0
        %338 = vmatpush1.msra.mxu0 0.0
        %339 = vmatprep.subr.mxu0 0.0
        %340 = vmatpush1.msra.mxu0 %v219
        %341 = vmatprep.subr.mxu0 0.0
        %342 = vmatpush1.msra.mxu0 %v218
        %343 = vmatprep.subr.mxu0 0.0
        %344 = vmatpush1.msra.mxu0 %v217
        %345 = vmatprep.subr.mxu0 0.0
        %346 = vmatpush1.msra.mxu0 %v216
        %347 = vmatprep.subr.mxu0 0.0
        %348 = vmatpush1.msra.mxu0 %v215
        %349 = vmatprep.subr.mxu0 0.0
        %350 = vmatpush2.msra.mxu0 0.0
        %351 = vmatprep.subr.mxu0 0.0
        %352 = vmatpush2.msra.mxu0 0.0
        %353 = vmatprep.subr.mxu0 0.0
        %354 = vmatpush2.msra.mxu0 0.0
        %355 = vmatprep.subr.mxu0 0.0
        %356 = vmatpush2.msra.mxu0 0.0
        %357 = vmatprep.subr.mxu0 0.0
        %358 = vmatpush2.msra.mxu0 0.0
        %359 = vmatprep.subr.mxu0 0.0
        %360 = vmatpush2.msra.mxu0 0.0
        %361 = vmatprep.subr.mxu0 0.0
        %362 = vmatpush2.msra.mxu0 0.0
        %363 = vmatprep.subr.mxu0 0.0
        %364 = vmatpush2.msra.mxu0 0.0
        %365 = vmatprep.subr.mxu0 0.0
        %366 = vmatpush2.msra.mxu0 0.0
        %367 = vmatprep.subr.mxu0 0.0
        %368 = vmatpush2.msra.mxu0 0.0
        %369 = vmatprep.subr.mxu0 0.0
        %370 = vmatpush2.msra.mxu0 0.0
        %371 = vmatprep.subr.mxu0 0.0
        %372 = vmatpush2.msra.mxu0 0.0
        %373 = vmatprep.subr.mxu0 0.0
        %374 = vmatpush2.msra.mxu0 0.0
        %375 = vmatprep.subr.mxu0 0.0
        %376 = vmatpush2.msra.mxu0 0.0
        %377 = vmatprep.subr.mxu0 0.0
        %378 = vmatpush2.msra.mxu0 0.0
        %379 = vmatprep.subr.mxu0 0.0
        %380 = vmatpush2.msra.mxu0 0.0
        %381 = vmatprep.mubr.f32.mxu0 0.0
        %382 = vmatmul.mubr.f32.gmra.mxu0 %v222
        %v383 = vpop.f32.mrf.mxu0
        %v384 = vadd.f32 0.0, %v383
        %v385 = vpop.f32.mrf.mxu0
        %386 = vmatprep.mubr.f32.mxu0 0.0
        %387 = vmatmul.mubr.f32.gmra.mxu0 %v225
        %v388 = vpop.f32.mrf.mxu0
        %v389 = vadd.f32 0.0, %v388
        %v390 = vpop.f32.mrf.mxu0
        %391 = vmatprep.mubr.f32.mxu0 0.0
        %392 = vmatmul.mubr.f32.gmra.mxu0 %v228
        %v393 = vpop.f32.mrf.mxu0
        %v394 = vadd.f32 0.0, %v393
        %v395 = vpop.f32.mrf.mxu0
        %396 = vmatprep.mubr.f32.mxu0 0.0
        %397 = vmatmul.mubr.f32.gmra.mxu0 %v231
        %v398 = vpop.f32.mrf.mxu0
        %v399 = vadd.f32 0.0, %v398
        %v400 = vpop.f32.mrf.mxu0
        %401 = vmatprep.mubr.f32.mxu0 0.0
        %402 = vmatmul.mubr.f32.gmra.mxu0 %v234
        %v403 = vpop.f32.mrf.mxu0
        %v404 = vadd.f32 0.0, %v403
        %v405 = vpop.f32.mrf.mxu0
        %406 = vmatprep.mubr.f32.mxu0 0.0
        %407 = vmatmul.mubr.f32.gmra.mxu0 %v237
        %v408 = vpop.f32.mrf.mxu0
        %v409 = vadd.f32 0.0, %v408
        %v410 = vpop.f32.mrf.mxu0
        %411 = vmatprep.mubr.f32.mxu0 0.0
        %412 = vmatmul.mubr.f32.gmra.mxu0 %v240
        %v413 = vpop.f32.mrf.mxu0
        %v414 = vadd.f32 0.0, %v413
        %v415 = vpop.f32.mrf.mxu0
        %416 = vmatprep.mubr.f32.mxu0 0.0
        %417 = vmatmul.mubr.f32.gmra.mxu0 %v243
        %v418 = vpop.f32.mrf.mxu0
        %v419 = vadd.f32 0.0, %v418
        %v420 = vpop.f32.mrf.mxu0
        %421 = vmatprep.mubr.f32.mxu0 0.0
        %422 = vmatmul.mubr.f32.gmra.mxu0 %v246
        %v423 = vpop.f32.mrf.mxu0
        %v424 = vadd.f32 0.0, %v423
        %v425 = vpop.f32.mrf.mxu0
        %426 = vmatprep.mubr.f32.mxu0 0.0
        %427 = vmatmul.mubr.f32.gmra.mxu0 %v249
        %v428 = vpop.f32.mrf.mxu0
        %v429 = vadd.f32 0.0, %v428
        %v430 = vpop.f32.mrf.mxu0
        %431 = vmatprep.mubr.f32.mxu0 0.0
        %432 = vmatmul.mubr.f32.gmra.mxu0 %v252
        %v433 = vpop.f32.mrf.mxu0
        %v434 = vadd.f32 0.0, %v433
        %v435 = vpop.f32.mrf.mxu0
        %436 = vmatprep.mubr.f32.mxu0 0.0
        %437 = vmatmul.mubr.f32.gmra.mxu0 %v255
        %v438 = vpop.f32.mrf.mxu0
        %v439 = vadd.f32 0.0, %v438
        %v440 = vpop.f32.mrf.mxu0
        %441 = vmatprep.mubr.f32.mxu0 0.0
        %442 = vmatmul.mubr.f32.gmra.mxu0 %v258
        %v443 = vpop.f32.mrf.mxu0
        %v444 = vadd.f32 0.0, %v443
        %v445 = vpop.f32.mrf.mxu0
        %446 = vmatprep.mubr.f32.mxu0 0.0
        %447 = vmatmul.mubr.f32.gmra.mxu0 %v261
        %v448 = vpop.f32.mrf.mxu0
        %v449 = vadd.f32 0.0, %v448
        %v450 = vpop.f32.mrf.mxu0
        %451 = vmatprep.mubr.f32.mxu0 0.0
        %452 = vmatmul.mubr.f32.gmra.mxu0 %v264
        %v453 = vpop.f32.mrf.mxu0
        %v454 = vadd.f32 0.0, %v453
        %v455 = vpop.f32.mrf.mxu0
        %456 = vmatprep.mubr.f32.mxu0 0.0
        %457 = vmatmul.mubr.f32.gmra.mxu0 %v267
        %v458 = vpop.f32.mrf.mxu0
        %v459 = vadd.f32 0.0, %v458
        %v460 = vpop.f32.mrf.mxu0
        %461 = vmatprep.mubr.f32.mxu0 0.0
        %462 = vmatmul.mubr.f32.gmra.mxu0 %v270
        %v463 = vpop.f32.mrf.mxu0
        %v464 = vadd.f32 0.0, %v463
        %v465 = vpop.f32.mrf.mxu0
        %466 = vmatprep.mubr.f32.mxu0 0.0
        %467 = vmatmul.mubr.f32.gmra.mxu0 %v273
        %v468 = vpop.f32.mrf.mxu0
        %v469 = vadd.f32 0.0, %v468
        %v470 = vpop.f32.mrf.mxu0
        %471 = vmatprep.mubr.f32.mxu0 0.0
        %472 = vmatmul.mubr.f32.gmra.mxu0 %v276
        %v473 = vpop.f32.mrf.mxu0
        %v474 = vadd.f32 0.0, %v473
        %v475 = vpop.f32.mrf.mxu0
        %476 = vmatprep.mubr.f32.mxu0 0.0
        %477 = vmatmul.mubr.f32.gmra.mxu0 %v279
        %v478 = vpop.f32.mrf.mxu0
        %v479 = vadd.f32 0.0, %v478
        %v480 = vpop.f32.mrf.mxu0
        %481 = vmatprep.mubr.f32.mxu0 0.0
        %482 = vmatmul.mubr.f32.gmra.mxu0 %v282
        %v483 = vpop.f32.mrf.mxu0
        %v484 = vadd.f32 0.0, %v483
        %v485 = vpop.f32.mrf.mxu0
        %486 = vmatprep.mubr.f32.mxu0 0.0
        %487 = vmatmul.mubr.f32.gmra.mxu0 %v285
        %v488 = vpop.f32.mrf.mxu0
        %v489 = vadd.f32 0.0, %v488
        %v490 = vpop.f32.mrf.mxu0
        %491 = vmatprep.mubr.f32.mxu0 0.0
        %492 = vmatmul.mubr.f32.gmra.mxu0 %v288
        %v493 = vpop.f32.mrf.mxu0
        %v494 = vadd.f32 0.0, %v493
        %v495 = vpop.f32.mrf.mxu0
        %496 = vmatprep.mubr.f32.mxu0 0.0
        %497 = vmatmul.mubr.f32.gmra.mxu0 %v291
        %v498 = vpop.f32.mrf.mxu0
        %v499 = vadd.f32 0.0, %v498
        %v500 = vpop.f32.mrf.mxu0
        %501 = vmatprep.mubr.f32.mxu0 0.0
        %502 = vmatmul.mubr.f32.gmra.mxu0 %v294
        %v503 = vpop.f32.mrf.mxu0
        %v504 = vadd.f32 0.0, %v503
        %v505 = vpop.f32.mrf.mxu0
        %506 = vmatprep.mubr.f32.mxu0 0.0
        %507 = vmatmul.mubr.f32.gmra.mxu0 %v297
        %v508 = vpop.f32.mrf.mxu0
        %v509 = vadd.f32 0.0, %v508
        %v510 = vpop.f32.mrf.mxu0
        %511 = vmatprep.mubr.f32.mxu0 0.0
        %512 = vmatmul.mubr.f32.gmra.mxu0 %v300
        %v513 = vpop.f32.mrf.mxu0
        %v514 = vadd.f32 0.0, %v513
        %v515 = vpop.f32.mrf.mxu0
        %516 = vmatprep.mubr.f32.mxu0 0.0
        %517 = vmatmul.mubr.f32.gmra.mxu0 %v303
        %v518 = vpop.f32.mrf.mxu0
        %v519 = vadd.f32 0.0, %v518
        %v520 = vpop.f32.mrf.mxu0
        %521 = vmatprep.mubr.f32.mxu0 0.0
        %522 = vmatmul.mubr.f32.gmra.mxu0 %v306
        %v523 = vpop.f32.mrf.mxu0
        %v524 = vadd.f32 0.0, %v523
        %v525 = vpop.f32.mrf.mxu0
        %526 = vmatprep.mubr.f32.mxu0 0.0
        %527 = vmatmul.mubr.f32.gmra.mxu0 %v309
        %v528 = vpop.f32.mrf.mxu0
        %v529 = vadd.f32 0.0, %v528
        %v530 = vpop.f32.mrf.mxu0
        %531 = vmatprep.mubr.f32.mxu0 0.0
        %532 = vmatmul.mubr.f32.gmra.mxu0 %v312
        %v533 = vpop.f32.mrf.mxu0
        %v534 = vadd.f32 0.0, %v533
        %v535 = vpop.f32.mrf.mxu0
        %536 = vmatprep.mubr.f32.mxu0 0.0
        %537 = vmatmul.mubr.f32.gmra.mxu0 %v315
        %v538 = vpop.f32.mrf.mxu0
        %v539 = vadd.f32 0.0, %v538
        %v540 = vpop.f32.mrf.mxu0
        %541 = vdwg.mxu0
        %542 = vst [vmem:[%s168] sm:$0xff] %v384
        %543 = vst [vmem:[%s168 + $0x8] sm:$0xff] %v389
        %544 = vst [vmem:[%s168 + $0x10] sm:$0xff] %v394
        %545 = vst [vmem:[%s168 + $0x18] sm:$0xff] %v399
        %546 = vst [vmem:[%s168 + $0x20] sm:$0xff] %v404
        %547 = vst [vmem:[%s168 + $0x28] sm:$0xff] %v409
        %548 = vst [vmem:[%s168 + $0x30] sm:$0xff] %v414
        %549 = vst [vmem:[%s168 + $0x38] sm:$0xff] %v419
        %550 = vst [vmem:[%s168 + $0x40] sm:$0xff] %v424
        %551 = vst [vmem:[%s168 + $0x48] sm:$0xff] %v429
        %552 = vst [vmem:[%s168 + $0x50] sm:$0xff] %v434
        %553 = vst [vmem:[%s168 + $0x58] sm:$0xff] %v439
        %554 = vst [vmem:[%s168 + $0x60] sm:$0xff] %v444
        %555 = vst [vmem:[%s168 + $0x68] sm:$0xff] %v449
        %556 = vst [vmem:[%s168 + $0x70] sm:$0xff] %v454
        %557 = vst [vmem:[%s168 + $0x78] sm:$0xff] %v459
        %558 = vst [vmem:[%s168 + $0x80] sm:$0xff] %v464
        %559 = vst [vmem:[%s168 + $0x88] sm:$0xff] %v469
        %560 = vst [vmem:[%s168 + $0x90] sm:$0xff] %v474
        %561 = vst [vmem:[%s168 + $0x98] sm:$0xff] %v479
        %562 = vst [vmem:[%s168 + $0xa0] sm:$0xff] %v484
        %563 = vst [vmem:[%s168 + $0xa8] sm:$0xff] %v489
        %564 = vst [vmem:[%s168 + $0xb0] sm:$0xff] %v494
        %565 = vst [vmem:[%s168 + $0xb8] sm:$0xff] %v499
        %566 = vst [vmem:[%s168 + $0xc0] sm:$0xff] %v504
        %567 = vst [vmem:[%s168 + $0xc8] sm:$0xff] %v509
        %568 = vst [vmem:[%s168 + $0xd0] sm:$0xff] %v514
        %569 = vst [vmem:[%s168 + $0xd8] sm:$0xff] %v519
        %570 = vst [vmem:[%s168 + $0xe0] sm:$0xff] %v524
        %571 = vst [vmem:[%s168 + $0xe8] sm:$0xff] %v529
        %572 = vst [vmem:[%s168 + $0xf0] sm:$0xff] %v534
        %573 = vst [vmem:[%s168 + $0xf8] sm:$0xff] %v539
        %s574 = smul.u32 %s21, 256
        %s575 = ssub.s32 512, %s574
        %p576 = scmp.lt.s32.totalorder %s575, 256
        %s577 = scalar_select %p576, %s575, 256
        %s578 = scvt.s32.f32 %s577
        %v579 = vstv %s578
        %v580 = vrcp.pop %v579
        %s581 = vtos %v580
        %v582 = vadd.f32 %v384, %v389
        %v583 = vadd.f32 %v582, %v394
        %v584 = vadd.f32 %v583, %v399
        %v585 = vadd.f32 %v584, %v404
        %v586 = vadd.f32 %v585, %v409
        %v587 = vadd.f32 %v586, %v414
        %v588 = vadd.f32 %v587, %v419
        %v589 = vadd.f32 %v588, %v424
        %v590 = vadd.f32 %v589, %v429
        %v591 = vadd.f32 %v590, %v434
        %v592 = vadd.f32 %v591, %v439
        %v593 = vadd.f32 %v592, %v444
        %v594 = vadd.f32 %v593, %v449
        %v595 = vadd.f32 %v594, %v454
        %v596 = vadd.f32 %v595, %v459
        %v597 = vadd.f32 %v596, %v464
        %v598 = vadd.f32 %v597, %v469
        %v599 = vadd.f32 %v598, %v474
        %v600 = vadd.f32 %v599, %v479
        %v601 = vadd.f32 %v600, %v484
        %v602 = vadd.f32 %v601, %v489
        %v603 = vadd.f32 %v602, %v494
        %v604 = vadd.f32 %v603, %v499
        %v605 = vadd.f32 %v604, %v504
        %v606 = vadd.f32 %v605, %v509
        %v607 = vadd.f32 %v606, %v514
        %v608 = vadd.f32 %v607, %v519
        %v609 = vadd.f32 %v608, %v524
        %v610 = vadd.f32 %v609, %v529
        %v611 = vadd.f32 %v610, %v534
        %v612 = vadd.f32 %v611, %v539
        %v613 = vrot.slane %v612, 4
        %v614 = vadd.f32 %v612, %v613
        %v615 = vrot.slane %v614, 2
        %v616 = vadd.f32 %v614, %v615
        %v617 = vrot.slane %v616, 1
        %v618 = vadd.f32 %v616, %v617
        %v619 = vstv %s581
        %v620 = vmul.f32 %v618, %v619
        %v621 = vlaneseq
        %v622 = vshrl.u32 %v621, 7
        %v623 = vadd.s32 %v622, 8
        %v624 = vadd.s32 %v622, 16
        %v625 = vadd.s32 %v622, 24
        %v626 = vadd.s32 %v622, 32
        %v627 = vadd.s32 %v622, 40
        %v628 = vadd.s32 %v622, 48
        %v629 = vadd.s32 %v622, 56
        %v630 = vadd.s32 %v622, 64
        %v631 = vadd.s32 %v622, 72
        %v632 = vadd.s32 %v622, 80
        %v633 = vadd.s32 %v622, 88
        %v634 = vadd.s32 %v622, 96
        %v635 = vadd.s32 %v622, 104
        %v636 = vadd.s32 %v622, 112
        %v637 = vadd.s32 %v622, 120
        %v638 = vadd.s32 %v622, 128
        %v639 = vadd.s32 %v622, 136
        %v640 = vadd.s32 %v622, 144
        %v641 = vadd.s32 %v622, 152
        %v642 = vadd.s32 %v622, 160
        %v643 = vadd.s32 %v622, 168
        %v644 = vadd.s32 %v622, 176
        %v645 = vadd.s32 %v622, 184
        %v646 = vadd.s32 %v622, 192
        %v647 = vadd.s32 %v622, 200
        %v648 = vadd.s32 %v622, 208
        %v649 = vadd.s32 %v622, 216
        %v650 = vadd.s32 %v622, 224
        %v651 = vadd.s32 %v622, 232
        %v652 = vadd.s32 %v622, 240
        %v653 = vadd.s32 %v622, 248
        %v654 = vstv %s577
        %vm655 = vcmp.lt.s32.totalorder %v622, %v654
        %vm656 = vcmp.lt.s32.totalorder %v623, %v654
        %vm657 = vcmp.lt.s32.totalorder %v624, %v654
        %vm658 = vcmp.lt.s32.totalorder %v625, %v654
        %vm659 = vcmp.lt.s32.totalorder %v626, %v654
        %vm660 = vcmp.lt.s32.totalorder %v627, %v654
        %vm661 = vcmp.lt.s32.totalorder %v628, %v654
        %vm662 = vcmp.lt.s32.totalorder %v629, %v654
        %vm663 = vcmp.lt.s32.totalorder %v630, %v654
        %vm664 = vcmp.lt.s32.totalorder %v631, %v654
        %vm665 = vcmp.lt.s32.totalorder %v632, %v654
        %vm666 = vcmp.lt.s32.totalorder %v633, %v654
        %vm667 = vcmp.lt.s32.totalorder %v634, %v654
        %vm668 = vcmp.lt.s32.totalorder %v635, %v654
        %vm669 = vcmp.lt.s32.totalorder %v636, %v654
        %vm670 = vcmp.lt.s32.totalorder %v637, %v654
        %vm671 = vcmp.lt.s32.totalorder %v638, %v654
        %vm672 = vcmp.lt.s32.totalorder %v639, %v654
        %vm673 = vcmp.lt.s32.totalorder %v640, %v654
        %vm674 = vcmp.lt.s32.totalorder %v641, %v654
        %vm675 = vcmp.lt.s32.totalorder %v642, %v654
        %vm676 = vcmp.lt.s32.totalorder %v643, %v654
        %vm677 = vcmp.lt.s32.totalorder %v644, %v654
        %vm678 = vcmp.lt.s32.totalorder %v645, %v654
        %vm679 = vcmp.lt.s32.totalorder %v646, %v654
        %vm680 = vcmp.lt.s32.totalorder %v647, %v654
        %vm681 = vcmp.lt.s32.totalorder %v648, %v654
        %vm682 = vcmp.lt.s32.totalorder %v649, %v654
        %vm683 = vcmp.lt.s32.totalorder %v650, %v654
        %vm684 = vcmp.lt.s32.totalorder %v651, %v654
        %vm685 = vcmp.lt.s32.totalorder %v652, %v654
        %vm686 = vcmp.lt.s32.totalorder %v653, %v654
        %v687 = vsel %vm655, 1, 0
        %v688 = vsel %vm656, 1, 0
        %v689 = vsel %vm657, 1, 0
        %v690 = vsel %vm658, 1, 0
        %v691 = vsel %vm659, 1, 0
        %v692 = vsel %vm660, 1, 0
        %v693 = vsel %vm661, 1, 0
        %v694 = vsel %vm662, 1, 0
        %v695 = vsel %vm663, 1, 0
        %v696 = vsel %vm664, 1, 0
        %v697 = vsel %vm665, 1, 0
        %v698 = vsel %vm666, 1, 0
        %v699 = vsel %vm667, 1, 0
        %v700 = vsel %vm668, 1, 0
        %v701 = vsel %vm669, 1, 0
        %v702 = vsel %vm670, 1, 0
        %v703 = vsel %vm671, 1, 0
        %v704 = vsel %vm672, 1, 0
        %v705 = vsel %vm673, 1, 0
        %v706 = vsel %vm674, 1, 0
        %v707 = vsel %vm675, 1, 0
        %v708 = vsel %vm676, 1, 0
        %v709 = vsel %vm677, 1, 0
        %v710 = vsel %vm678, 1, 0
        %v711 = vsel %vm679, 1, 0
        %v712 = vsel %vm680, 1, 0
        %v713 = vsel %vm681, 1, 0
        %v714 = vsel %vm682, 1, 0
        %v715 = vsel %vm683, 1, 0
        %v716 = vsel %vm684, 1, 0
        %v717 = vsel %vm685, 1, 0
        %v718 = vsel %vm686, 1, 0
        %v719 = vcvt.s32.f32 %v687
        %v720 = vcvt.s32.f32 %v688
        %v721 = vcvt.s32.f32 %v689
        %v722 = vcvt.s32.f32 %v690
        %v723 = vcvt.s32.f32 %v691
        %v724 = vcvt.s32.f32 %v692
        %v725 = vcvt.s32.f32 %v693
        %v726 = vcvt.s32.f32 %v694
        %v727 = vcvt.s32.f32 %v695
        %v728 = vcvt.s32.f32 %v696
        %v729 = vcvt.s32.f32 %v697
        %v730 = vcvt.s32.f32 %v698
        %v731 = vcvt.s32.f32 %v699
        %v732 = vcvt.s32.f32 %v700
        %v733 = vcvt.s32.f32 %v701
        %v734 = vcvt.s32.f32 %v702
        %v735 = vcvt.s32.f32 %v703
        %v736 = vcvt.s32.f32 %v704
        %v737 = vcvt.s32.f32 %v705
        %v738 = vcvt.s32.f32 %v706
        %v739 = vcvt.s32.f32 %v707
        %v740 = vcvt.s32.f32 %v708
        %v741 = vcvt.s32.f32 %v709
        %v742 = vcvt.s32.f32 %v710
        %v743 = vcvt.s32.f32 %v711
        %v744 = vcvt.s32.f32 %v712
        %v745 = vcvt.s32.f32 %v713
        %v746 = vcvt.s32.f32 %v714
        %v747 = vcvt.s32.f32 %v715
        %v748 = vcvt.s32.f32 %v716
        %v749 = vcvt.s32.f32 %v717
        %v750 = vcvt.s32.f32 %v718
        %v751 = vsub.f32 %v384, %v620
        %v752 = vsub.f32 %v389, %v620
        %v753 = vsub.f32 %v394, %v620
        %v754 = vsub.f32 %v399, %v620
        %v755 = vsub.f32 %v404, %v620
        %v756 = vsub.f32 %v409, %v620
        %v757 = vsub.f32 %v414, %v620
        %v758 = vsub.f32 %v419, %v620
        %v759 = vsub.f32 %v424, %v620
        %v760 = vsub.f32 %v429, %v620
        %v761 = vsub.f32 %v434, %v620
        %v762 = vsub.f32 %v439, %v620
        %v763 = vsub.f32 %v444, %v620
        %v764 = vsub.f32 %v449, %v620
        %v765 = vsub.f32 %v454, %v620
        %v766 = vsub.f32 %v459, %v620
        %v767 = vsub.f32 %v464, %v620
        %v768 = vsub.f32 %v469, %v620
        %v769 = vsub.f32 %v474, %v620
        %v770 = vsub.f32 %v479, %v620
        %v771 = vsub.f32 %v484, %v620
        %v772 = vsub.f32 %v489, %v620
        %v773 = vsub.f32 %v494, %v620
        %v774 = vsub.f32 %v499, %v620
        %v775 = vsub.f32 %v504, %v620
        %v776 = vsub.f32 %v509, %v620
        %v777 = vsub.f32 %v514, %v620
        %v778 = vsub.f32 %v519, %v620
        %v779 = vsub.f32 %v524, %v620
        %v780 = vsub.f32 %v529, %v620
        %v781 = vsub.f32 %v534, %v620
        %v782 = vsub.f32 %v539, %v620
        %v783 = vmul.f32 %v751, %v719
        %v784 = vmul.f32 %v752, %v720
        %v785 = vmul.f32 %v753, %v721
        %v786 = vmul.f32 %v754, %v722
        %v787 = vmul.f32 %v755, %v723
        %v788 = vmul.f32 %v756, %v724
        %v789 = vmul.f32 %v757, %v725
        %v790 = vmul.f32 %v758, %v726
        %v791 = vmul.f32 %v759, %v727
        %v792 = vmul.f32 %v760, %v728
        %v793 = vmul.f32 %v761, %v729
        %v794 = vmul.f32 %v762, %v730
        %v795 = vmul.f32 %v763, %v731
        %v796 = vmul.f32 %v764, %v732
        %v797 = vmul.f32 %v765, %v733
        %v798 = vmul.f32 %v766, %v734
        %v799 = vmul.f32 %v767, %v735
        %v800 = vmul.f32 %v768, %v736
        %v801 = vmul.f32 %v769, %v737
        %v802 = vmul.f32 %v770, %v738
        %v803 = vmul.f32 %v771, %v739
        %v804 = vmul.f32 %v772, %v740
        %v805 = vmul.f32 %v773, %v741
        %v806 = vmul.f32 %v774, %v742
        %v807 = vmul.f32 %v775, %v743
        %v808 = vmul.f32 %v776, %v744
        %v809 = vmul.f32 %v777, %v745
        %v810 = vmul.f32 %v778, %v746
        %v811 = vmul.f32 %v779, %v747
        %v812 = vmul.f32 %v780, %v748
        %v813 = vmul.f32 %v781, %v749
        %v814 = vmul.f32 %v782, %v750
        %v815 = vmul.f32 %v783, %v783
        %v816 = vmul.f32 %v784, %v784
        %v817 = vmul.f32 %v785, %v785
        %v818 = vmul.f32 %v786, %v786
        %v819 = vmul.f32 %v787, %v787
        %v820 = vmul.f32 %v788, %v788
        %v821 = vmul.f32 %v789, %v789
        %v822 = vmul.f32 %v790, %v790
        %v823 = vmul.f32 %v791, %v791
        %v824 = vmul.f32 %v792, %v792
        %v825 = vmul.f32 %v793, %v793
        %v826 = vmul.f32 %v794, %v794
        %v827 = vmul.f32 %v795, %v795
        %v828 = vmul.f32 %v796, %v796
        %v829 = vmul.f32 %v797, %v797
        %v830 = vmul.f32 %v798, %v798
        %v831 = vmul.f32 %v799, %v799
        %v832 = vmul.f32 %v800, %v800
        %v833 = vmul.f32 %v801, %v801
        %v834 = vmul.f32 %v802, %v802
        %v835 = vmul.f32 %v803, %v803
        %v836 = vmul.f32 %v804, %v804
        %v837 = vmul.f32 %v805, %v805
        %v838 = vmul.f32 %v806, %v806
        %v839 = vmul.f32 %v807, %v807
        %v840 = vmul.f32 %v808, %v808
        %v841 = vmul.f32 %v809, %v809
        %v842 = vmul.f32 %v810, %v810
        %v843 = vmul.f32 %v811, %v811
        %v844 = vmul.f32 %v812, %v812
        %v845 = vmul.f32 %v813, %v813
        %v846 = vmul.f32 %v814, %v814
        %v847 = vadd.f32 %v815, %v816
        %v848 = vadd.f32 %v847, %v817
        %v849 = vadd.f32 %v848, %v818
        %v850 = vadd.f32 %v849, %v819
        %v851 = vadd.f32 %v850, %v820
        %v852 = vadd.f32 %v851, %v821
        %v853 = vadd.f32 %v852, %v822
        %v854 = vadd.f32 %v853, %v823
        %v855 = vadd.f32 %v854, %v824
        %v856 = vadd.f32 %v855, %v825
        %v857 = vadd.f32 %v856, %v826
        %v858 = vadd.f32 %v857, %v827
        %v859 = vadd.f32 %v858, %v828
        %v860 = vadd.f32 %v859, %v829
        %v861 = vadd.f32 %v860, %v830
        %v862 = vadd.f32 %v861, %v831
        %v863 = vadd.f32 %v862, %v832
        %v864 = vadd.f32 %v863, %v833
        %v865 = vadd.f32 %v864, %v834
        %v866 = vadd.f32 %v865, %v835
        %v867 = vadd.f32 %v866, %v836
        %v868 = vadd.f32 %v867, %v837
        %v869 = vadd.f32 %v868, %v838
        %v870 = vadd.f32 %v869, %v839
        %v871 = vadd.f32 %v870, %v840
        %v872 = vadd.f32 %v871, %v841
        %v873 = vadd.f32 %v872, %v842
        %v874 = vadd.f32 %v873, %v843
        %v875 = vadd.f32 %v874, %v844
        %v876 = vadd.f32 %v875, %v845
        %v877 = vadd.f32 %v876, %v846
        %v878 = vrot.slane %v877, 4
        %v879 = vadd.f32 %v877, %v878
        %v880 = vrot.slane %v879, 2
        %v881 = vadd.f32 %v879, %v880
        %v882 = vrot.slane %v881, 1
        %v883 = vadd.f32 %v881, %v882
        %884 = vst [vmem:[%s175] sm:$0x1] %v620
        %885 = vst [vmem:[%s175 + $0x1] sm:$0x1] %v883
        %s886 = sand.u32 %s76, 1
        %s887 = scalar_lea.sflag [#allocation3], %s886
        %s888 = sand.u32 %s76, 1
        %s889 = smul.addr %s888, 256
        %s890 = scalar_lea.vmem [#allocation2], %s889
        %s891 = sand.u32 %s102, 1
        %s892 = scalar_lea.sflag [#allocation5], %s891
        %s893 = sand.u32 %s102, 1
        %s894 = smul.addr %s893, 2
        %s895 = scalar_lea.vmem [#allocation4], %s894
        // Predicated region
        $region29: #{tpu_custom_call.1} parent=27 // pred_check
          %p896 = pneg %p86
        $region30: #{tpu_custom_call.1} parent=27 // pred_check_branch
          %898 = sbr.rel (%p896) target = $region32
        $region31: #{tpu_custom_call.1} parent=27 // pred_region
          %s899 = smul.u32 32, %s21
          %s901 = ssub.s32 4096, 4096
          %902 = vsyncadd %s887, %s901
          %s903 = smul.addr %s899, 128
          %s904 = scalar_lea.hbm %s2, %s903
          %s905 = sshll.u32 %s890, 4
          %s906 = int_to_ptr.vmem [resolvable:$true] %s905
          %911 = dma.vmem_to_hbm [thread:$0]  %s906, 4096, %s904, %s887, 128, 128, 8
        $region32: #{tpu_custom_call.1} parent=27 // pred_fallthru
          _
        // Predicated region
        $region33: #{tpu_custom_call.1} parent=27 // pred_check
          %p912 = pneg %p112
        $region34: #{tpu_custom_call.1} parent=27 // pred_check_branch
          %914 = sbr.rel (%p912) target = $region36
        $region35: #{tpu_custom_call.1} parent=27 // pred_region
          %s916 = ssub.s32 32, 32
          %917 = vsyncadd %s892, %s916
          %s918 = smul.addr %s21, 32
          %s919 = scalar_lea.hbm %s3, %s918
          %s921 = sshll.u32 %s895, 4
          %s922 = int_to_ptr.vmem [resolvable:$true] %s921
          %924 = dma.vmem_to_hbm [thread:$0]  %s922, 32, %s919, %s892
        $region36: #{tpu_custom_call.1} parent=27 // pred_fallthru
          _
      $region28: #{tpu_custom_call.1} parent=5 // pred_fallthru
        _
      %p925 = scmp.le.s32.totalorder 2, %s16
      // Predicated region
      $region37: #{tpu_custom_call.1} parent=5 // pred_check
        %p926 = pneg %p925
      $region38: #{tpu_custom_call.1} parent=5 // pred_check_branch
        %928 = sbr.rel (%p926) target = $region40
      $region39: #{tpu_custom_call.1} parent=5 // pred_region
        %s929 = ssub.s32 %s16, 2
        // Predicated region
        $region41: #{tpu_custom_call.1} parent=39 // pred_check
          %p930 = pneg %p92
        $region42: #{tpu_custom_call.1} parent=39 // pred_check_branch
          %932 = sbr.rel (%p930) target = $region44
        $region43: #{tpu_custom_call.1} parent=39 // pred_region
          %s933 = sand.u32 %s77, 1
          %s934 = scalar_lea.sflag [#allocation3], %s933
          %s935 = sand.u32 %s77, 1
          %s936 = smul.addr %s935, 256
          %s937 = scalar_lea.vmem [#allocation2], %s936
          %938 = dma.done %s934, 4096
        $region44: #{tpu_custom_call.1} parent=39 // pred_fallthru
          _
        // Predicated region
        $region45: #{tpu_custom_call.1} parent=39 // pred_check
          %p939 = pneg %p118
        $region46: #{tpu_custom_call.1} parent=39 // pred_check_branch
          %941 = sbr.rel (%p939) target = $region48
        $region47: #{tpu_custom_call.1} parent=39 // pred_region
          %s942 = sand.u32 %s103, 1
          %s943 = scalar_lea.sflag [#allocation5], %s942
          %s944 = sand.u32 %s103, 1
          %s945 = smul.addr %s944, 2
          %s946 = scalar_lea.vmem [#allocation4], %s945
          %947 = dma.done %s943, 32
        $region48: #{tpu_custom_call.1} parent=39 // pred_fallthru
          _
      $region40: #{tpu_custom_call.1} parent=5 // pred_fallthru
        _
    $region6: #{tpu_custom_call.1} parent=1 // loop_footer
      %s20 = sadd.s32 1, %s16
    $region7: #{tpu_custom_call.1} parent=1 // loop_footer_branch
      %15 = sbr.rel target = $region3
    $region8: #{tpu_custom_call.1} parent=1 // loop_exit
      _
    %948 = vsyncpa [#allocation3], 1
    %s949 = scalar_lea.sflag [#allocation3], 1
    %950 = vsyncpa %s949, 1
    %951 = vsyncpa [#allocation5], 1
    %s952 = scalar_lea.sflag [#allocation5], 1
    %953 = vsyncpa %s952, 1

</llo_original>
